<compile_context>
chip_gen: v6e
topology: v6e:2x2x1
jax: 0.10.0
libtpu: 0.0.40
codegen_flags: <defaults>
</compile_context>

<pallas_src>
import functools

import jax
import jax.numpy as jnp
from jax.experimental import pallas as pl
from jax.experimental.pallas import tpu as pltpu


def _round_up(x, m):
    return ((x + m - 1) // m) * m


# --------------------------------------------------------------------------------------
# Kernels
# --------------------------------------------------------------------------------------
def _decoder_fused_kernel(x0_ref, h0_ref, c0_ref, w_ref, h_out_ref, c_out_ref, xh_scr,
                          *, n_layers, H_pad, X_seg):
    """grid=(1,): all layers in one fully-unrolled in-kernel loop (small models)."""
    # Initial fused operand [x | 0 | 1 | 0] was built on the host: one full-block copy.
    xh_scr[...] = x0_ref[...]

    for l in range(n_layers):
        # Current layer's recurrent hidden state into the (128-aligned) h segment.
        xh_scr[:, X_seg:X_seg + H_pad] = h0_ref[l]

        # Single bf16 MXU matmul, f32 accumulation:
        #   gates = [x | h | 1] @ [W_ih ; W_hh ; b]   -> (B_pad, 4*H_pad)
        gates = jnp.dot(xh_scr[...].astype(w_ref.dtype), w_ref[l],
                        preferred_element_type=jnp.float32)

        # Gate layout [i, f, o, g]; sigmoid gates are one contiguous 128-aligned slice.
        sig = jax.nn.sigmoid(gates[:, 0:3 * H_pad])
        g_g = jnp.tanh(gates[:, 3 * H_pad:4 * H_pad])
        i_g = sig[:, 0:H_pad]
        f_g = sig[:, H_pad:2 * H_pad]
        o_g = sig[:, 2 * H_pad:3 * H_pad]

        c_new = f_g * c0_ref[l] + i_g * g_g
        h_new = o_g * jnp.tanh(c_new)

        h_out_ref[l] = h_new
        c_out_ref[l] = c_new

        if l + 1 < n_layers:
            # This layer's output is the next layer's input (cols [0, H_pad); the stale
            # tail [H_pad, X_seg) multiplies zero weight rows of layers >= 1).
            xh_scr[:, 0:H_pad] = h_new


def _decoder_stream_kernel(x0_ref, h0_ref, c0_ref, w_ref, h_out_ref, c_out_ref, xh_scr,
                           *, H_pad, X_seg):
    """grid=(L,): one layer per grid step; per-layer weight block is pipeline-prefetched."""
    l = pl.program_id(0)

    @pl.when(l == 0)
    def _():
        xh_scr[...] = x0_ref[...]

    xh_scr[:, X_seg:X_seg + H_pad] = h0_ref[0]

    gates = jnp.dot(xh_scr[...].astype(w_ref.dtype), w_ref[0],
                    preferred_element_type=jnp.float32)

    sig = jax.nn.sigmoid(gates[:, 0:3 * H_pad])
    g_g = jnp.tanh(gates[:, 3 * H_pad:4 * H_pad])
    i_g = sig[:, 0:H_pad]
    f_g = sig[:, H_pad:2 * H_pad]
    o_g = sig[:, 2 * H_pad:3 * H_pad]

    c_new = f_g * c0_ref[0] + i_g * g_g
    h_new = o_g * jnp.tanh(c_new)

    h_out_ref[0] = h_new.astype(h_out_ref.dtype)
    c_out_ref[0] = c_new.astype(c_out_ref.dtype)

    xh_scr[:, 0:H_pad] = h_new


# --------------------------------------------------------------------------------------
# Parameter construction / packing
# --------------------------------------------------------------------------------------
def init_decoder_params(key, word_vec_size, hidden_size, n_layers):
    """PyTorch-layout LSTM params: per layer (w_ih (4H,in), w_hh (4H,H), b_ih, b_hh),
    gate order [i, f, g, o], uniform(-1/sqrt(H), 1/sqrt(H))."""
    H = hidden_size
    bound = 1.0 / (H ** 0.5)
    params = []
    for layer in range(n_layers):
        in_dim = (word_vec_size + hidden_size) if layer == 0 else hidden_size
        key, k1, k2, k3, k4 = jax.random.split(key, 5)
        w_ih = jax.random.uniform(k1, (4 * H, in_dim), jnp.float32, -bound, bound)
        w_hh = jax.random.uniform(k2, (4 * H, H), jnp.float32, -bound, bound)
        b_ih = jax.random.uniform(k3, (4 * H,), jnp.float32, -bound, bound)
        b_hh = jax.random.uniform(k4, (4 * H,), jnp.float32, -bound, bound)
        params.append((w_ih, w_hh, b_ih, b_hh))
    return params


def pack_decoder_params(params, word_vec_size, hidden_size, weight_dtype=jnp.bfloat16):
    """Pack PyTorch-layout params into the stacked kernel weight (L, K_pad, 4*H_pad).

    Row layout (128-aligned segments):
        rows [0, in_dim)            : W_ih^T           (zero-padded to X_seg)
        rows [X_seg, X_seg+H)       : W_hh^T           (zero-padded to H_pad)
        row  X_seg + H_pad          : b_ih + b_hh      (rest of 128-row block zero)
    Column layout: gates permuted [i,f,g,o] -> [i,f,o,g], each padded to H_pad columns.
    """
    H = hidden_size
    H_pad = _round_up(H, 128)
    Din = word_vec_size + hidden_size
    X_seg = _round_up(Din, 128)
    K_pad = X_seg + H_pad + 128
    N = 4 * H_pad
    gate_perm = (0, 1, 3, 2)  # target order [i, f, o, g] from PyTorch [i, f, g, o]

    blocks = []
    for (w_ih, w_hh, b_ih, b_hh) in params:
        in_dim = w_ih.shape[1]
        b = b_ih + b_hh
        blk = jnp.zeros((K_pad, N), jnp.float32)
        for tgt, src in enumerate(gate_perm):
            cols = slice(tgt * H_pad, tgt * H_pad + H)
            rows = slice(src * H, (src + 1) * H)
            blk = blk.at[0:in_dim, cols].set(w_ih[rows, :].T)
            blk = blk.at[X_seg:X_seg + H, cols].set(w_hh[rows, :].T)
            blk = blk.at[X_seg + H_pad, cols].set(b[rows])
        blocks.append(blk.astype(weight_dtype))
    return jnp.stack(blocks, axis=0)  # (L, K_pad, 4*H_pad)


# --------------------------------------------------------------------------------------
# Padded core step (suitable for persistent padded state + donate_argnums=(1, 2))
# --------------------------------------------------------------------------------------
def decoder_step_padded(x_op, h0p, c0p, w_stack):
    """x_op (B_pad, K_pad) fused operand, h0p/c0p (L, B_pad, H_pad) f32 padded state,
    w_stack (L, K_pad, 4*H_pad).  Returns padded (h_new, c_new); aliased onto h0p/c0p."""
    L, B_pad, H_pad = h0p.shape
    _, K_pad, N = w_stack.shape
    X_seg = K_pad - H_pad - 128

    fused = (w_stack.size * jnp.dtype(w_stack.dtype).itemsize) <= (4 << 20)

    out_shape = (jax.ShapeDtypeStruct((L, B_pad, H_pad), h0p.dtype),
                 jax.ShapeDtypeStruct((L, B_pad, H_pad), c0p.dtype))
    compiler_params = pltpu.CompilerParams(
        dimension_semantics=("arbitrary",),          # layers are sequentially dependent
        vmem_limit_bytes=32 * 1024 * 1024)

    if fused:
        kernel = functools.partial(_decoder_fused_kernel,
                                   n_layers=L, H_pad=H_pad, X_seg=X_seg)
        grid_spec = pltpu.PrefetchScalarGridSpec(
            num_scalar_prefetch=0,
            grid=(1,),
            in_specs=[
                pl.BlockSpec((B_pad, K_pad), lambda i: (0, 0)),
                pl.BlockSpec((L, B_pad, H_pad), lambda i: (0, 0, 0)),
                pl.BlockSpec((L, B_pad, H_pad), lambda i: (0, 0, 0)),
                pl.BlockSpec((L, K_pad, N), lambda i: (0, 0, 0)),
            ],
            out_specs=(
                pl.BlockSpec((L, B_pad, H_pad), lambda i: (0, 0, 0)),
                pl.BlockSpec((L, B_pad, H_pad), lambda i: (0, 0, 0)),
            ),
            scratch_shapes=[pltpu.VMEM((B_pad, K_pad), jnp.float32)])
    else:
        kernel = functools.partial(_decoder_stream_kernel, H_pad=H_pad, X_seg=X_seg)
        grid_spec = pltpu.PrefetchScalarGridSpec(
            num_scalar_prefetch=0,
            grid=(L,),
            in_specs=[
                pl.BlockSpec((B_pad, K_pad), lambda l: (0, 0)),
                pl.BlockSpec((1, B_pad, H_pad), lambda l: (l, 0, 0)),
                pl.BlockSpec((1, B_pad, H_pad), lambda l: (l, 0, 0)),
                pl.BlockSpec((1, K_pad, N), lambda l: (l, 0, 0)),
            ],
            out_specs=(
                pl.BlockSpec((1, B_pad, H_pad), lambda l: (l, 0, 0)),
                pl.BlockSpec((1, B_pad, H_pad), lambda l: (l, 0, 0)),
            ),
            scratch_shapes=[pltpu.VMEM((B_pad, K_pad), jnp.float32)])

    return pl.pallas_call(
        kernel,
        out_shape=out_shape,
        grid_spec=grid_spec,
        # In-place recurrent-state update (true in-place HBM when callers donate h0p/c0p).
        input_output_aliases={1: 0, 2: 1},
        compiler_params=compiler_params,
    )(x_op, h0p, c0p, w_stack)


# --------------------------------------------------------------------------------------
# Forward pass (mirrors Decoder.forward; inference semantics)
# --------------------------------------------------------------------------------------
def decoder_forward(emb_t, h_t_1_tilde, h_t_1, w_stack):
    """emb_t (B,1,W), h_t_1_tilde (B,1,H) or None, h_t_1 = (h0,c0) each (L,B,H),
    w_stack (L,K_pad,4*H_pad) from pack_decoder_params.
    Returns y (B,1,H), (h_new (L,B,H), c_new (L,B,H))."""
    B, _, W = emb_t.shape
    h0, c0 = h_t_1
    L, _, H = h0.shape
    if h_t_1_tilde is None:
        h_t_1_tilde = jnp.zeros((B, 1, H), emb_t.dtype)

    _, K_pad, N = w_stack.shape
    H_pad = N // 4
    X_seg = K_pad - H_pad - 128
    Din = W + H
    B_pad = max(8, _round_up(B, 8))

    # TODO(synk): nn.LSTM inter-layer dropout applies only in training mode; skipped here.
    x = jnp.concatenate([emb_t, h_t_1_tilde], axis=-1)[:, 0, :].astype(jnp.float32)

    # Fused matmul operand built on the host: [ x | 0 (h segment) | 1 (bias col) | 0 ].
    x_op = jnp.zeros((B_pad, K_pad), jnp.float32)
    x_op = x_op.at[:B, :Din].set(x)
    x_op = x_op.at[:, X_seg + H_pad].set(1.0)

    # Pad the state to (L, B_pad, H_pad).  For a real decode loop, keep the state in this
    # padded layout across time steps and jit with donate_argnums so the aliasing in
    # decoder_step_padded becomes a true in-place update (no per-step pad/slice copies).
    h0p = jnp.zeros((L, B_pad, H_pad), jnp.float32).at[:, :B, :H].set(
        h0.astype(jnp.float32))
    c0p = jnp.zeros((L, B_pad, H_pad), jnp.float32).at[:, :B, :H].set(
        c0.astype(jnp.float32))

    h_new_p, c_new_p = decoder_step_padded(x_op, h0p, c0p, w_stack)

    h_new = h_new_p[:, :B, :H]
    c_new = c_new_p[:, :B, :H]
    y = h_new[-1][:, None, :]  # (B, 1, H), batch_first output for seq_len == 1
    return y, (h_new, c_new)


# --------------------------------------------------------------------------------------
# Pure-JAX reference (PyTorch layout / gate order) for correctness checking
# --------------------------------------------------------------------------------------
def decoder_reference(emb_t, h_t_1_tilde, h_t_1, params, cast_dtype=None):
    """Plain-JAX LSTM reference.  If cast_dtype is given, weights / biases / matmul inputs
    are rounded to that dtype (emulating the kernel's bf16 weight packing) but all math is
    done in f32 with HIGHEST precision."""
    B = emb_t.shape[0]
    h0, c0 = h_t_1
    H = h0.shape[-1]
    if h_t_1_tilde is None:
        h_t_1_tilde = jnp.zeros((B, 1, H), emb_t.dtype)
    x = jnp.concatenate([emb_t, h_t_1_tilde], axis=-1)[:, 0, :]
    hp = jax.lax.Precision.HIGHEST

    def rnd(a):
        if cast_dtype is None:
            return a
        return a.astype(cast_dtype).astype(jnp.float32)

    new_h, new_c = [], []
    inp = x
    for layer, (w_ih, w_hh, b_ih, b_hh) in enumerate(params):
        w_ih_c, w_hh_c = rnd(w_ih), rnd(w_hh)
        b_c = rnd(b_ih + b_hh)
        inp_c, h_c = rnd(inp), rnd(h0[layer])
        gates = (jnp.dot(inp_c, w_ih_c.T, precision=hp)
                 + jnp.dot(h_c, w_hh_c.T, precision=hp) + b_c)
        i = jax.nn.sigmoid(gates[:, 0:H])
        f = jax.nn.sigmoid(gates[:, H:2 * H])
        g = jnp.tanh(gates[:, 2 * H:3 * H])
        o = jax.nn.sigmoid(gates[:, 3 * H:4 * H])
        c = f * c0[layer] + i * g
        h = o * jnp.tanh(c)
        new_h.append(h)
        new_c.append(c)
        inp = h
    return inp[:, None, :], (jnp.stack(new_h, 0), jnp.stack(new_c, 0))


if __name__ == "__main__":
    word_vec_size = 32
    hidden_size = 32
    n_layers = 4
    B = 2

    root = jax.random.PRNGKey(0)
    k_p, k_e, k_t, k_h, k_c = jax.random.split(root, 5)

    params = init_decoder_params(k_p, word_vec_size, hidden_size, n_layers)
    w_stack = pack_decoder_params(params, word_vec_size, hidden_size,
                                  weight_dtype=jnp.bfloat16)

    emb_t = jax.random.normal(k_e, (B, 1, word_vec_size), jnp.float32)
    h_t_1_tilde = jax.random.normal(k_t, (B, 1, hidden_size), jnp.float32)
    h0 = jax.random.normal(k_h, (n_layers, B, hidden_size), jnp.float32)
    c0 = jax.random.normal(k_c, (n_layers, B, hidden_size), jnp.float32)

    fwd = jax.jit(decoder_forward)
    y, (h_new, c_new) = fwd(emb_t, h_t_1_tilde, (h0, c0), w_stack)
    jax.block_until_ready((y, h_new, c_new))

    # Tight check: reference emulating the kernel's bf16 weight/operand rounding.
    y_q, (h_q, c_q) = decoder_reference(emb_t, h_t_1_tilde, (h0, c0), params,
                                        cast_dtype=jnp.bfloat16)
    err_q = max(float(jnp.max(jnp.abs(y - y_q))),
                float(jnp.max(jnp.abs(h_new - h_q))),
                float(jnp.max(jnp.abs(c_new - c_q))))
    assert err_q < 1e-3, f"mismatch vs bf16-emulating reference: {err_q}"

    # Loose sanity check vs the exact f32 reference (bf16 weight rounding error only).
    y_ref, (h_ref, c_ref) = decoder_reference(emb_t, h_t_1_tilde, (h0, c0), params)
    err = max(float(jnp.max(jnp.abs(y - y_ref))),
              float(jnp.max(jnp.abs(h_new - h_ref))),
              float(jnp.max(jnp.abs(c_new - c_ref))))
    assert err < 5e-2, f"mismatch vs f32 reference: {err}"

    assert y.shape == (B, 1, hidden_size)
    assert h_new.shape == (n_layers, B, hidden_size)
    assert c_new.shape == (n_layers, B, hidden_size)
    print("KERNEL_OK")
</pallas_src>

<mosaic_0001>
module attributes {stable_mosaic.version = 11 : i64} {
  func.func @_decoder_fused_kernel(%arg0: i32, %arg1: memref<8x384xf32, #tpu.memory_space<vmem>>, %arg2: memref<4x8x128xf32, #tpu.memory_space<vmem>>, %arg3: memref<4x8x128xf32, #tpu.memory_space<vmem>>, %arg4: memref<4x384x512xbf16, #tpu.memory_space<vmem>>, %arg5: memref<4x8x128xf32, #tpu.memory_space<vmem>>, %arg6: memref<4x8x128xf32, #tpu.memory_space<vmem>>, %arg7: memref<8x384xf32, #tpu.memory_space<vmem>>) attributes {dimension_semantics = [#tpu.dimension_semantics<arbitrary>], iteration_bounds = array<i64: 1>, scalar_prefetch = 0 : i64, scratch_operands = 1 : i64, tpu.core_type = #tpu.core_type<tc>, window_params = [{pipeline_mode = #tpu.pipeline_mode<synchronous>, transform_indices = @transform_0, window_bounds = array<i64: 8, 384>}, {pipeline_mode = #tpu.pipeline_mode<synchronous>, transform_indices = @transform_1, window_bounds = array<i64: 4, 8, 128>}, {pipeline_mode = #tpu.pipeline_mode<synchronous>, transform_indices = @transform_2, window_bounds = array<i64: 4, 8, 128>}, {pipeline_mode = #tpu.pipeline_mode<synchronous>, transform_indices = @transform_3, window_bounds = array<i64: 4, 384, 512>}, {pipeline_mode = #tpu.pipeline_mode<synchronous>, transform_indices = @transform_4, window_bounds = array<i64: 4, 8, 128>}, {pipeline_mode = #tpu.pipeline_mode<synchronous>, transform_indices = @transform_5, window_bounds = array<i64: 4, 8, 128>}]} {
    %c0 = arith.constant 0 : index
    %c0_0 = arith.constant 0 : index
    %0 = vector.load %arg1[%c0, %c0_0] : memref<8x384xf32, #tpu.memory_space<vmem>>, vector<8x384xf32>
    %c0_1 = arith.constant 0 : index
    %c0_2 = arith.constant 0 : index
    %1 = vector.load %arg7[%c0_1, %c0_2] : memref<8x384xf32, #tpu.memory_space<vmem>>, vector<8x384xf32>
    tpu.vector_store %arg7[%c0_1, %c0_2], %0 {strides = array<i32>} : memref<8x384xf32, #tpu.memory_space<vmem>>, vector<8x384xf32>,
    %c0_3 = arith.constant 0 : index
    %c0_4 = arith.constant 0 : index
    %c0_5 = arith.constant 0 : index
    %2 = vector.load %arg2[%c0_3, %c0_4, %c0_5] : memref<4x8x128xf32, #tpu.memory_space<vmem>>, vector<1x8x128xf32>
    %3 = vector.shape_cast %2 : vector<1x8x128xf32> to vector<8x128xf32>
    %c0_6 = arith.constant 0 : index
    %c128 = arith.constant 128 : index
    %4 = vector.load %arg7[%c0_6, %c128] : memref<8x384xf32, #tpu.memory_space<vmem>>, vector<8x128xf32>
    tpu.vector_store %arg7[%c0_6, %c128], %3 {strides = array<i32>} : memref<8x384xf32, #tpu.memory_space<vmem>>, vector<8x128xf32>,
    %c0_7 = arith.constant 0 : index
    %c0_8 = arith.constant 0 : index
    %5 = vector.load %arg7[%c0_7, %c0_8] : memref<8x384xf32, #tpu.memory_space<vmem>>, vector<8x384xf32>
    %6 = arith.truncf %5 : vector<8x384xf32> to vector<8x384xbf16>
    %c0_9 = arith.constant 0 : index
    %c0_10 = arith.constant 0 : index
    %c0_11 = arith.constant 0 : index
    %7 = vector.load %arg4[%c0_9, %c0_10, %c0_11] : memref<4x384x512xbf16, #tpu.memory_space<vmem>>, vector<1x384x512xbf16>
    %8 = vector.shape_cast %7 : vector<1x384x512xbf16> to vector<384x512xbf16>
    %cst = arith.constant dense<0.000000e+00> : vector<8x512xf32>
    %9 = tpu.matmul %6, %8, %cst {dimension_numbers = #tpu.dot_dimension_numbers<[1], [0], [0], [1], [0, 0, 1, 1], [], []>} : vector<8x384xbf16>, vector<384x512xbf16>, vector<8x512xf32> -> vector<8x512xf32>
    %10 = vector.extract_strided_slice %9 {offsets = [0, 0], sizes = [8, 384], strides = [1, 1]} : vector<8x512xf32> to vector<8x384xf32>
    %11 = arith.negf %10 : vector<8x384xf32>
    %12 = math.exp %11 : vector<8x384xf32>
    %cst_12 = arith.constant 1.000000e+00 : f32
    %13 = vector.broadcast %cst_12 : f32 to vector<8x384xf32>
    %14 = arith.addf %13, %12 : vector<8x384xf32>
    %15 = arith.divf %13, %14 : vector<8x384xf32>
    %16 = vector.extract_strided_slice %9 {offsets = [0, 384], sizes = [8, 128], strides = [1, 1]} : vector<8x512xf32> to vector<8x128xf32>
    %17 = math.tanh %16 : vector<8x128xf32>
    %18 = vector.extract_strided_slice %15 {offsets = [0, 0], sizes = [8, 128], strides = [1, 1]} : vector<8x384xf32> to vector<8x128xf32>
    %19 = vector.extract_strided_slice %15 {offsets = [0, 128], sizes = [8, 128], strides = [1, 1]} : vector<8x384xf32> to vector<8x128xf32>
    %20 = vector.extract_strided_slice %15 {offsets = [0, 256], sizes = [8, 128], strides = [1, 1]} : vector<8x384xf32> to vector<8x128xf32>
    %c0_13 = arith.constant 0 : index
    %c0_14 = arith.constant 0 : index
    %c0_15 = arith.constant 0 : index
    %21 = vector.load %arg3[%c0_13, %c0_14, %c0_15] : memref<4x8x128xf32, #tpu.memory_space<vmem>>, vector<1x8x128xf32>
    %22 = vector.shape_cast %21 : vector<1x8x128xf32> to vector<8x128xf32>
    %23 = arith.mulf %19, %22 : vector<8x128xf32>
    %24 = arith.mulf %18, %17 : vector<8x128xf32>
    %25 = arith.addf %23, %24 : vector<8x128xf32>
    %26 = math.tanh %25 : vector<8x128xf32>
    %27 = arith.mulf %20, %26 : vector<8x128xf32>
    %c0_16 = arith.constant 0 : index
    %c0_17 = arith.constant 0 : index
    %c0_18 = arith.constant 0 : index
    %28 = vector.load %arg5[%c0_16, %c0_17, %c0_18] : memref<4x8x128xf32, #tpu.memory_space<vmem>>, vector<1x8x128xf32>
    %29 = vector.shape_cast %28 : vector<1x8x128xf32> to vector<8x128xf32>
    %30 = vector.shape_cast %27 : vector<8x128xf32> to vector<1x8x128xf32>
    tpu.vector_store %arg5[%c0_16, %c0_17, %c0_18], %30 {strides = array<i32>} : memref<4x8x128xf32, #tpu.memory_space<vmem>>, vector<1x8x128xf32>,
    %c0_19 = arith.constant 0 : index
    %c0_20 = arith.constant 0 : index
    %c0_21 = arith.constant 0 : index
    %31 = vector.load %arg6[%c0_19, %c0_20, %c0_21] : memref<4x8x128xf32, #tpu.memory_space<vmem>>, vector<1x8x128xf32>
    %32 = vector.shape_cast %31 : vector<1x8x128xf32> to vector<8x128xf32>
    %33 = vector.shape_cast %25 : vector<8x128xf32> to vector<1x8x128xf32>
    tpu.vector_store %arg6[%c0_19, %c0_20, %c0_21], %33 {strides = array<i32>} : memref<4x8x128xf32, #tpu.memory_space<vmem>>, vector<1x8x128xf32>,
    %c0_22 = arith.constant 0 : index
    %c0_23 = arith.constant 0 : index
    %34 = vector.load %arg7[%c0_22, %c0_23] : memref<8x384xf32, #tpu.memory_space<vmem>>, vector<8x128xf32>
    tpu.vector_store %arg7[%c0_22, %c0_23], %27 {strides = array<i32>} : memref<8x384xf32, #tpu.memory_space<vmem>>, vector<8x128xf32>,
    %c1 = arith.constant 1 : index
    %c0_24 = arith.constant 0 : index
    %c0_25 = arith.constant 0 : index
    %35 = vector.load %arg2[%c1, %c0_24, %c0_25] : memref<4x8x128xf32, #tpu.memory_space<vmem>>, vector<1x8x128xf32>
    %36 = vector.shape_cast %35 : vector<1x8x128xf32> to vector<8x128xf32>
    %c0_26 = arith.constant 0 : index
    %c128_27 = arith.constant 128 : index
    %37 = vector.load %arg7[%c0_26, %c128_27] : memref<8x384xf32, #tpu.memory_space<vmem>>, vector<8x128xf32>
    tpu.vector_store %arg7[%c0_26, %c128_27], %36 {strides = array<i32>} : memref<8x384xf32, #tpu.memory_space<vmem>>, vector<8x128xf32>,
    %c0_28 = arith.constant 0 : index
    %c0_29 = arith.constant 0 : index
    %38 = vector.load %arg7[%c0_28, %c0_29] : memref<8x384xf32, #tpu.memory_space<vmem>>, vector<8x384xf32>
    %39 = arith.truncf %38 : vector<8x384xf32> to vector<8x384xbf16>
    %c1_30 = arith.constant 1 : index
    %c0_31 = arith.constant 0 : index
    %c0_32 = arith.constant 0 : index
    %40 = vector.load %arg4[%c1_30, %c0_31, %c0_32] : memref<4x384x512xbf16, #tpu.memory_space<vmem>>, vector<1x384x512xbf16>
    %41 = vector.shape_cast %40 : vector<1x384x512xbf16> to vector<384x512xbf16>
    %cst_33 = arith.constant dense<0.000000e+00> : vector<8x512xf32>
    %42 = tpu.matmul %39, %41, %cst_33 {dimension_numbers = #tpu.dot_dimension_numbers<[1], [0], [0], [1], [0, 0, 1, 1], [], []>} : vector<8x384xbf16>, vector<384x512xbf16>, vector<8x512xf32> -> vector<8x512xf32>
    %43 = vector.extract_strided_slice %42 {offsets = [0, 0], sizes = [8, 384], strides = [1, 1]} : vector<8x512xf32> to vector<8x384xf32>
    %44 = arith.negf %43 : vector<8x384xf32>
    %45 = math.exp %44 : vector<8x384xf32>
    %cst_34 = arith.constant 1.000000e+00 : f32
    %46 = vector.broadcast %cst_34 : f32 to vector<8x384xf32>
    %47 = arith.addf %46, %45 : vector<8x384xf32>
    %48 = arith.divf %46, %47 : vector<8x384xf32>
    %49 = vector.extract_strided_slice %42 {offsets = [0, 384], sizes = [8, 128], strides = [1, 1]} : vector<8x512xf32> to vector<8x128xf32>
    %50 = math.tanh %49 : vector<8x128xf32>
    %51 = vector.extract_strided_slice %48 {offsets = [0, 0], sizes = [8, 128], strides = [1, 1]} : vector<8x384xf32> to vector<8x128xf32>
    %52 = vector.extract_strided_slice %48 {offsets = [0, 128], sizes = [8, 128], strides = [1, 1]} : vector<8x384xf32> to vector<8x128xf32>
    %53 = vector.extract_strided_slice %48 {offsets = [0, 256], sizes = [8, 128], strides = [1, 1]} : vector<8x384xf32> to vector<8x128xf32>
    %c1_35 = arith.constant 1 : index
    %c0_36 = arith.constant 0 : index
    %c0_37 = arith.constant 0 : index
    %54 = vector.load %arg3[%c1_35, %c0_36, %c0_37] : memref<4x8x128xf32, #tpu.memory_space<vmem>>, vector<1x8x128xf32>
    %55 = vector.shape_cast %54 : vector<1x8x128xf32> to vector<8x128xf32>
    %56 = arith.mulf %52, %55 : vector<8x128xf32>
    %57 = arith.mulf %51, %50 : vector<8x128xf32>
    %58 = arith.addf %56, %57 : vector<8x128xf32>
    %59 = math.tanh %58 : vector<8x128xf32>
    %60 = arith.mulf %53, %59 : vector<8x128xf32>
    %c1_38 = arith.constant 1 : index
    %c0_39 = arith.constant 0 : index
    %c0_40 = arith.constant 0 : index
    %61 = vector.load %arg5[%c1_38, %c0_39, %c0_40] : memref<4x8x128xf32, #tpu.memory_space<vmem>>, vector<1x8x128xf32>
    %62 = vector.shape_cast %61 : vector<1x8x128xf32> to vector<8x128xf32>
    %63 = vector.shape_cast %60 : vector<8x128xf32> to vector<1x8x128xf32>
    tpu.vector_store %arg5[%c1_38, %c0_39, %c0_40], %63 {strides = array<i32>} : memref<4x8x128xf32, #tpu.memory_space<vmem>>, vector<1x8x128xf32>,
    %c1_41 = arith.constant 1 : index
    %c0_42 = arith.constant 0 : index
    %c0_43 = arith.constant 0 : index
    %64 = vector.load %arg6[%c1_41, %c0_42, %c0_43] : memref<4x8x128xf32, #tpu.memory_space<vmem>>, vector<1x8x128xf32>
    %65 = vector.shape_cast %64 : vector<1x8x128xf32> to vector<8x128xf32>
    %66 = vector.shape_cast %58 : vector<8x128xf32> to vector<1x8x128xf32>
    tpu.vector_store %arg6[%c1_41, %c0_42, %c0_43], %66 {strides = array<i32>} : memref<4x8x128xf32, #tpu.memory_space<vmem>>, vector<1x8x128xf32>,
    %c0_44 = arith.constant 0 : index
    %c0_45 = arith.constant 0 : index
    %67 = vector.load %arg7[%c0_44, %c0_45] : memref<8x384xf32, #tpu.memory_space<vmem>>, vector<8x128xf32>
    tpu.vector_store %arg7[%c0_44, %c0_45], %60 {strides = array<i32>} : memref<8x384xf32, #tpu.memory_space<vmem>>, vector<8x128xf32>,
    %c2 = arith.constant 2 : index
    %c0_46 = arith.constant 0 : index
    %c0_47 = arith.constant 0 : index
    %68 = vector.load %arg2[%c2, %c0_46, %c0_47] : memref<4x8x128xf32, #tpu.memory_space<vmem>>, vector<1x8x128xf32>
    %69 = vector.shape_cast %68 : vector<1x8x128xf32> to vector<8x128xf32>
    %c0_48 = arith.constant 0 : index
    %c128_49 = arith.constant 128 : index
    %70 = vector.load %arg7[%c0_48, %c128_49] : memref<8x384xf32, #tpu.memory_space<vmem>>, vector<8x128xf32>
    tpu.vector_store %arg7[%c0_48, %c128_49], %69 {strides = array<i32>} : memref<8x384xf32, #tpu.memory_space<vmem>>, vector<8x128xf32>,
    %c0_50 = arith.constant 0 : index
    %c0_51 = arith.constant 0 : index
    %71 = vector.load %arg7[%c0_50, %c0_51] : memref<8x384xf32, #tpu.memory_space<vmem>>, vector<8x384xf32>
    %72 = arith.truncf %71 : vector<8x384xf32> to vector<8x384xbf16>
    %c2_52 = arith.constant 2 : index
    %c0_53 = arith.constant 0 : index
    %c0_54 = arith.constant 0 : index
    %73 = vector.load %arg4[%c2_52, %c0_53, %c0_54] : memref<4x384x512xbf16, #tpu.memory_space<vmem>>, vector<1x384x512xbf16>
    %74 = vector.shape_cast %73 : vector<1x384x512xbf16> to vector<384x512xbf16>
    %cst_55 = arith.constant dense<0.000000e+00> : vector<8x512xf32>
    %75 = tpu.matmul %72, %74, %cst_55 {dimension_numbers = #tpu.dot_dimension_numbers<[1], [0], [0], [1], [0, 0, 1, 1], [], []>} : vector<8x384xbf16>, vector<384x512xbf16>, vector<8x512xf32> -> vector<8x512xf32>
    %76 = vector.extract_strided_slice %75 {offsets = [0, 0], sizes = [8, 384], strides = [1, 1]} : vector<8x512xf32> to vector<8x384xf32>
    %77 = arith.negf %76 : vector<8x384xf32>
    %78 = math.exp %77 : vector<8x384xf32>
    %cst_56 = arith.constant 1.000000e+00 : f32
    %79 = vector.broadcast %cst_56 : f32 to vector<8x384xf32>
    %80 = arith.addf %79, %78 : vector<8x384xf32>
    %81 = arith.divf %79, %80 : vector<8x384xf32>
    %82 = vector.extract_strided_slice %75 {offsets = [0, 384], sizes = [8, 128], strides = [1, 1]} : vector<8x512xf32> to vector<8x128xf32>
    %83 = math.tanh %82 : vector<8x128xf32>
    %84 = vector.extract_strided_slice %81 {offsets = [0, 0], sizes = [8, 128], strides = [1, 1]} : vector<8x384xf32> to vector<8x128xf32>
    %85 = vector.extract_strided_slice %81 {offsets = [0, 128], sizes = [8, 128], strides = [1, 1]} : vector<8x384xf32> to vector<8x128xf32>
    %86 = vector.extract_strided_slice %81 {offsets = [0, 256], sizes = [8, 128], strides = [1, 1]} : vector<8x384xf32> to vector<8x128xf32>
    %c2_57 = arith.constant 2 : index
    %c0_58 = arith.constant 0 : index
    %c0_59 = arith.constant 0 : index
    %87 = vector.load %arg3[%c2_57, %c0_58, %c0_59] : memref<4x8x128xf32, #tpu.memory_space<vmem>>, vector<1x8x128xf32>
    %88 = vector.shape_cast %87 : vector<1x8x128xf32> to vector<8x128xf32>
    %89 = arith.mulf %85, %88 : vector<8x128xf32>
    %90 = arith.mulf %84, %83 : vector<8x128xf32>
    %91 = arith.addf %89, %90 : vector<8x128xf32>
    %92 = math.tanh %91 : vector<8x128xf32>
    %93 = arith.mulf %86, %92 : vector<8x128xf32>
    %c2_60 = arith.constant 2 : index
    %c0_61 = arith.constant 0 : index
    %c0_62 = arith.constant 0 : index
    %94 = vector.load %arg5[%c2_60, %c0_61, %c0_62] : memref<4x8x128xf32, #tpu.memory_space<vmem>>, vector<1x8x128xf32>
    %95 = vector.shape_cast %94 : vector<1x8x128xf32> to vector<8x128xf32>
    %96 = vector.shape_cast %93 : vector<8x128xf32> to vector<1x8x128xf32>
    tpu.vector_store %arg5[%c2_60, %c0_61, %c0_62], %96 {strides = array<i32>} : memref<4x8x128xf32, #tpu.memory_space<vmem>>, vector<1x8x128xf32>,
    %c2_63 = arith.constant 2 : index
    %c0_64 = arith.constant 0 : index
    %c0_65 = arith.constant 0 : index
    %97 = vector.load %arg6[%c2_63, %c0_64, %c0_65] : memref<4x8x128xf32, #tpu.memory_space<vmem>>, vector<1x8x128xf32>
    %98 = vector.shape_cast %97 : vector<1x8x128xf32> to vector<8x128xf32>
    %99 = vector.shape_cast %91 : vector<8x128xf32> to vector<1x8x128xf32>
    tpu.vector_store %arg6[%c2_63, %c0_64, %c0_65], %99 {strides = array<i32>} : memref<4x8x128xf32, #tpu.memory_space<vmem>>, vector<1x8x128xf32>,
    %c0_66 = arith.constant 0 : index
    %c0_67 = arith.constant 0 : index
    %100 = vector.load %arg7[%c0_66, %c0_67] : memref<8x384xf32, #tpu.memory_space<vmem>>, vector<8x128xf32>
    tpu.vector_store %arg7[%c0_66, %c0_67], %93 {strides = array<i32>} : memref<8x384xf32, #tpu.memory_space<vmem>>, vector<8x128xf32>,
    %c3 = arith.constant 3 : index
    %c0_68 = arith.constant 0 : index
    %c0_69 = arith.constant 0 : index
    %101 = vector.load %arg2[%c3, %c0_68, %c0_69] : memref<4x8x128xf32, #tpu.memory_space<vmem>>, vector<1x8x128xf32>
    %102 = vector.shape_cast %101 : vector<1x8x128xf32> to vector<8x128xf32>
    %c0_70 = arith.constant 0 : index
    %c128_71 = arith.constant 128 : index
    %103 = vector.load %arg7[%c0_70, %c128_71] : memref<8x384xf32, #tpu.memory_space<vmem>>, vector<8x128xf32>
    tpu.vector_store %arg7[%c0_70, %c128_71], %102 {strides = array<i32>} : memref<8x384xf32, #tpu.memory_space<vmem>>, vector<8x128xf32>,
    %c0_72 = arith.constant 0 : index
    %c0_73 = arith.constant 0 : index
    %104 = vector.load %arg7[%c0_72, %c0_73] : memref<8x384xf32, #tpu.memory_space<vmem>>, vector<8x384xf32>
    %105 = arith.truncf %104 : vector<8x384xf32> to vector<8x384xbf16>
    %c3_74 = arith.constant 3 : index
    %c0_75 = arith.constant 0 : index
    %c0_76 = arith.constant 0 : index
    %106 = vector.load %arg4[%c3_74, %c0_75, %c0_76] : memref<4x384x512xbf16, #tpu.memory_space<vmem>>, vector<1x384x512xbf16>
    %107 = vector.shape_cast %106 : vector<1x384x512xbf16> to vector<384x512xbf16>
    %cst_77 = arith.constant dense<0.000000e+00> : vector<8x512xf32>
    %108 = tpu.matmul %105, %107, %cst_77 {dimension_numbers = #tpu.dot_dimension_numbers<[1], [0], [0], [1], [0, 0, 1, 1], [], []>} : vector<8x384xbf16>, vector<384x512xbf16>, vector<8x512xf32> -> vector<8x512xf32>
    %109 = vector.extract_strided_slice %108 {offsets = [0, 0], sizes = [8, 384], strides = [1, 1]} : vector<8x512xf32> to vector<8x384xf32>
    %110 = arith.negf %109 : vector<8x384xf32>
    %111 = math.exp %110 : vector<8x384xf32>
    %cst_78 = arith.constant 1.000000e+00 : f32
    %112 = vector.broadcast %cst_78 : f32 to vector<8x384xf32>
    %113 = arith.addf %112, %111 : vector<8x384xf32>
    %114 = arith.divf %112, %113 : vector<8x384xf32>
    %115 = vector.extract_strided_slice %108 {offsets = [0, 384], sizes = [8, 128], strides = [1, 1]} : vector<8x512xf32> to vector<8x128xf32>
    %116 = math.tanh %115 : vector<8x128xf32>
    %117 = vector.extract_strided_slice %114 {offsets = [0, 0], sizes = [8, 128], strides = [1, 1]} : vector<8x384xf32> to vector<8x128xf32>
    %118 = vector.extract_strided_slice %114 {offsets = [0, 128], sizes = [8, 128], strides = [1, 1]} : vector<8x384xf32> to vector<8x128xf32>
    %119 = vector.extract_strided_slice %114 {offsets = [0, 256], sizes = [8, 128], strides = [1, 1]} : vector<8x384xf32> to vector<8x128xf32>
    %c3_79 = arith.constant 3 : index
    %c0_80 = arith.constant 0 : index
    %c0_81 = arith.constant 0 : index
    %120 = vector.load %arg3[%c3_79, %c0_80, %c0_81] : memref<4x8x128xf32, #tpu.memory_space<vmem>>, vector<1x8x128xf32>
    %121 = vector.shape_cast %120 : vector<1x8x128xf32> to vector<8x128xf32>
    %122 = arith.mulf %118, %121 : vector<8x128xf32>
    %123 = arith.mulf %117, %116 : vector<8x128xf32>
    %124 = arith.addf %122, %123 : vector<8x128xf32>
    %125 = math.tanh %124 : vector<8x128xf32>
    %126 = arith.mulf %119, %125 : vector<8x128xf32>
    %c3_82 = arith.constant 3 : index
    %c0_83 = arith.constant 0 : index
    %c0_84 = arith.constant 0 : index
    %127 = vector.load %arg5[%c3_82, %c0_83, %c0_84] : memref<4x8x128xf32, #tpu.memory_space<vmem>>, vector<1x8x128xf32>
    %128 = vector.shape_cast %127 : vector<1x8x128xf32> to vector<8x128xf32>
    %129 = vector.shape_cast %126 : vector<8x128xf32> to vector<1x8x128xf32>
    tpu.vector_store %arg5[%c3_82, %c0_83, %c0_84], %129 {strides = array<i32>} : memref<4x8x128xf32, #tpu.memory_space<vmem>>, vector<1x8x128xf32>,
    %c3_85 = arith.constant 3 : index
    %c0_86 = arith.constant 0 : index
    %c0_87 = arith.constant 0 : index
    %130 = vector.load %arg6[%c3_85, %c0_86, %c0_87] : memref<4x8x128xf32, #tpu.memory_space<vmem>>, vector<1x8x128xf32>
    %131 = vector.shape_cast %130 : vector<1x8x128xf32> to vector<8x128xf32>
    %132 = vector.shape_cast %124 : vector<8x128xf32> to vector<1x8x128xf32>
    tpu.vector_store %arg6[%c3_85, %c0_86, %c0_87], %132 {strides = array<i32>} : memref<4x8x128xf32, #tpu.memory_space<vmem>>, vector<1x8x128xf32>,
    return
  }
  func.func @transform_0(%arg0: i32) -> (i32, i32) {
    %c0_i32 = arith.constant 0 : i32
    %c0_i32_0 = arith.constant 0 : i32
    %c0_i32_1 = arith.constant 0 : i32
    return %c0_i32, %c0_i32_0 : i32, i32
  }
  func.func @transform_1(%arg0: i32) -> (i32, i32, i32) {
    %c0_i32 = arith.constant 0 : i32
    %c0_i32_0 = arith.constant 0 : i32
    %c0_i32_1 = arith.constant 0 : i32
    %c0_i32_2 = arith.constant 0 : i32
    return %c0_i32, %c0_i32_0, %c0_i32_1 : i32, i32, i32
  }
  func.func @transform_2(%arg0: i32) -> (i32, i32, i32) {
    %c0_i32 = arith.constant 0 : i32
    %c0_i32_0 = arith.constant 0 : i32
    %c0_i32_1 = arith.constant 0 : i32
    %c0_i32_2 = arith.constant 0 : i32
    return %c0_i32, %c0_i32_0, %c0_i32_1 : i32, i32, i32
  }
  func.func @transform_3(%arg0: i32) -> (i32, i32, i32) {
    %c0_i32 = arith.constant 0 : i32
    %c0_i32_0 = arith.constant 0 : i32
    %c0_i32_1 = arith.constant 0 : i32
    %c0_i32_2 = arith.constant 0 : i32
    return %c0_i32, %c0_i32_0, %c0_i32_1 : i32, i32, i32
  }
  func.func @transform_4(%arg0: i32) -> (i32, i32, i32) {
    %c0_i32 = arith.constant 0 : i32
    %c0_i32_0 = arith.constant 0 : i32
    %c0_i32_1 = arith.constant 0 : i32
    %c0_i32_2 = arith.constant 0 : i32
    return %c0_i32, %c0_i32_0, %c0_i32_1 : i32, i32, i32
  }
  func.func @transform_5(%arg0: i32) -> (i32, i32, i32) {
    %c0_i32 = arith.constant 0 : i32
    %c0_i32_0 = arith.constant 0 : i32
    %c0_i32_1 = arith.constant 0 : i32
    %c0_i32_2 = arith.constant 0 : i32
    return %c0_i32, %c0_i32_0, %c0_i32_1 : i32, i32, i32
  }
}

</mosaic_0001>

<llo_original>
// kernel: decoder_forward.1
$region0: #{decoder_forward.1}
  #allocation0 [shape = 'u32[]', space=smem, size = 0x4, offset = 0x4, fixed_abs, tag = 'smem constant byte address 0x4 - core index']
  #allocation1 [shape = 'u32[144,128]{1,0:T(1,128)}', space=vmem, size = 0x12000, scoped, tag = 'internal scratch']
  #allocation2 [shape = 'f32[8,384]{1,0:T(8,128)}', space=vmem, size = 0x3000, scoped, tag = 'scratch operand']
  %s0 = inlined_call_operand.vmem [shape: f32[8,384], index: 0, kind: input, shape index: {}]
  %s1 = inlined_call_operand.vmem [shape: f32[4,8,128], index: 1, kind: input, shape index: {}, may-alias: {1,4}]
  %s2 = inlined_call_operand.vmem [shape: f32[4,8,128], index: 2, kind: input, shape index: {}, may-alias: {2,5}]
  %s3 = inlined_call_operand.hbm [shape: bf16[4,384,512], index: 3, kind: input, shape index: {}]
  %s4 = inlined_call_operand.vmem [shape: f32[4,8,128], index: 4, kind: output, shape index: {0}, may-alias: {1,4}]
  %s5 = inlined_call_operand.vmem [shape: f32[4,8,128], index: 5, kind: output, shape index: {1}, may-alias: {2,5}]
  %6 = xla_tuple %s4, %s5
  %s7 = sld [smem:[#allocation0]]
  $region38: #{decoder_forward.1} parent=0
    _
  %s9 = ssub.s32 1, %s7
  %s10 = scalar_select 0, %s9, %s7
  $region1: #{decoder_forward.1} parent=0
    #allocation3 [shape = 'u8[1572864]{0}', space=vmem, size = 0x180000, scoped, tag = 'input window, operand 3, single buffered']
    #allocation4 [shape = 's32[1]{0}', space=sflag, size = 0x4, scoped, tag = 'scoped memory for decoder_forward.1']
    %11 = vsyncpa [#allocation4], 0
    // Predicated region
    $region2: #{decoder_forward.1} parent=1 // pred_check
      _
    $region3: #{decoder_forward.1} parent=1 // pred_check_branch
      %13 = sbr.rel (0) target = $region5
    $region4: #{decoder_forward.1} parent=1 // pred_region
      _
    $region5: #{decoder_forward.1} parent=1 // pred_fallthru
      _
    // Predicated region
    $region6: #{decoder_forward.1} parent=1 // pred_check
      _
    $region7: #{decoder_forward.1} parent=1 // pred_check_branch
      %15 = sbr.rel (0) target = $region9
    $region8: #{decoder_forward.1} parent=1 // pred_region
      _
    $region9: #{decoder_forward.1} parent=1 // pred_fallthru
      _
    // Predicated region
    $region10: #{decoder_forward.1} parent=1 // pred_check
      _
    $region11: #{decoder_forward.1} parent=1 // pred_check_branch
      %17 = sbr.rel (0) target = $region13
    $region12: #{decoder_forward.1} parent=1 // pred_region
      _
    $region13: #{decoder_forward.1} parent=1 // pred_fallthru
      _
    // Predicated region
    $region14: #{decoder_forward.1} parent=1 // pred_check
      _
    $region15: #{decoder_forward.1} parent=1 // pred_check_branch
      %19 = sbr.rel (0) target = $region17
    $region16: #{decoder_forward.1} parent=1 // pred_region
      %s21 = ssub.s32 49152, 49152
      %22 = vsyncadd [#allocation4], %s21
      %s23 = sshll.u32 [#allocation3], 4
      %s24 = int_to_ptr.vmem [resolvable:$true] %s23
      %29 = dma.hbm_to_vmem [thread:$0]  %s3, 49152, %s24, [#allocation4], 256, 256, 16
    $region17: #{decoder_forward.1} parent=1 // pred_fallthru
      _
    // Predicated region
    $region18: #{decoder_forward.1} parent=1 // pred_check
      _
    $region19: #{decoder_forward.1} parent=1 // pred_check_branch
      %31 = sbr.rel (0) target = $region21
    $region20: #{decoder_forward.1} parent=1 // pred_region
      %32 = dma.done [#allocation4], 49152
    $region21: #{decoder_forward.1} parent=1 // pred_fallthru
      _
    %v34 = vld [vmem:[%s0] sm:$0xff]
    %v35 = vld [vmem:[%s0 + $0x8] sm:$0xff]
    %v36 = vld [vmem:[%s0 + $0x10] sm:$0xff]
    %37 = vst [vmem:[#allocation2] sm:$0xff] %v34
    %38 = vst [vmem:[#allocation2 + $0x8] sm:$0xff] %v35
    %39 = vst [vmem:[#allocation2 + $0x10] sm:$0xff] %v36
    %v40 = vld [vmem:[%s1] sm:$0xff]
    %41 = vst [vmem:[#allocation2 + $0x8] sm:$0xff] %v40
    %v42 = vld [vmem:[#allocation2] sm:$0xff]
    %v43 = vld [vmem:[#allocation2 + $0x8] sm:$0xff]
    %v44 = vld [vmem:[#allocation2 + $0x10] sm:$0xff]
    %v45 = vpack.c.bf16 %v42, %v42
    %v46 = vpack.c.bf16 %v43, %v43
    %v47 = vpack.c.bf16 %v44, %v44
    %v48 = vld [vmem:[#allocation3] sm:$0xff]
    %v49 = vld [vmem:[#allocation3 + $0x8] sm:$0xff]
    %v50 = vld [vmem:[#allocation3 + $0x10] sm:$0xff]
    %v51 = vld [vmem:[#allocation3 + $0x18] sm:$0xff]
    %v52 = vld [vmem:[#allocation3 + $0x20] sm:$0xff]
    %v53 = vld [vmem:[#allocation3 + $0x28] sm:$0xff]
    %v54 = vld [vmem:[#allocation3 + $0x30] sm:$0xff]
    %v55 = vld [vmem:[#allocation3 + $0x38] sm:$0xff]
    %v56 = vld [vmem:[#allocation3 + $0x40] sm:$0xff]
    %v57 = vld [vmem:[#allocation3 + $0x48] sm:$0xff]
    %v58 = vld [vmem:[#allocation3 + $0x50] sm:$0xff]
    %v59 = vld [vmem:[#allocation3 + $0x58] sm:$0xff]
    %v60 = vld [vmem:[#allocation3 + $0x60] sm:$0xff]
    %v61 = vld [vmem:[#allocation3 + $0x68] sm:$0xff]
    %v62 = vld [vmem:[#allocation3 + $0x70] sm:$0xff]
    %v63 = vld [vmem:[#allocation3 + $0x78] sm:$0xff]
    %v64 = vld [vmem:[#allocation3 + $0x80] sm:$0xff]
    %v65 = vld [vmem:[#allocation3 + $0x88] sm:$0xff]
    %v66 = vld [vmem:[#allocation3 + $0x90] sm:$0xff]
    %v67 = vld [vmem:[#allocation3 + $0x98] sm:$0xff]
    %v68 = vld [vmem:[#allocation3 + $0xa0] sm:$0xff]
    %v69 = vld [vmem:[#allocation3 + $0xa8] sm:$0xff]
    %v70 = vld [vmem:[#allocation3 + $0xb0] sm:$0xff]
    %v71 = vld [vmem:[#allocation3 + $0xb8] sm:$0xff]
    %v72 = vld [vmem:[#allocation3 + $0xc0] sm:$0xff]
    %v73 = vld [vmem:[#allocation3 + $0xc8] sm:$0xff]
    %v74 = vld [vmem:[#allocation3 + $0xd0] sm:$0xff]
    %v75 = vld [vmem:[#allocation3 + $0xd8] sm:$0xff]
    %v76 = vld [vmem:[#allocation3 + $0xe0] sm:$0xff]
    %v77 = vld [vmem:[#allocation3 + $0xe8] sm:$0xff]
    %v78 = vld [vmem:[#allocation3 + $0xf0] sm:$0xff]
    %v79 = vld [vmem:[#allocation3 + $0xf8] sm:$0xff]
    %v80 = vld [vmem:[#allocation3 + $0x100] sm:$0xff]
    %v81 = vld [vmem:[#allocation3 + $0x108] sm:$0xff]
    %v82 = vld [vmem:[#allocation3 + $0x110] sm:$0xff]
    %v83 = vld [vmem:[#allocation3 + $0x118] sm:$0xff]
    %v84 = vld [vmem:[#allocation3 + $0x120] sm:$0xff]
    %v85 = vld [vmem:[#allocation3 + $0x128] sm:$0xff]
    %v86 = vld [vmem:[#allocation3 + $0x130] sm:$0xff]
    %v87 = vld [vmem:[#allocation3 + $0x138] sm:$0xff]
    %v88 = vld [vmem:[#allocation3 + $0x140] sm:$0xff]
    %v89 = vld [vmem:[#allocation3 + $0x148] sm:$0xff]
    %v90 = vld [vmem:[#allocation3 + $0x150] sm:$0xff]
    %v91 = vld [vmem:[#allocation3 + $0x158] sm:$0xff]
    %v92 = vld [vmem:[#allocation3 + $0x160] sm:$0xff]
    %v93 = vld [vmem:[#allocation3 + $0x168] sm:$0xff]
    %v94 = vld [vmem:[#allocation3 + $0x170] sm:$0xff]
    %v95 = vld [vmem:[#allocation3 + $0x178] sm:$0xff]
    %v96 = vld [vmem:[#allocation3 + $0x180] sm:$0xff]
    %v97 = vld [vmem:[#allocation3 + $0x188] sm:$0xff]
    %v98 = vld [vmem:[#allocation3 + $0x190] sm:$0xff]
    %v99 = vld [vmem:[#allocation3 + $0x198] sm:$0xff]
    %v100 = vld [vmem:[#allocation3 + $0x1a0] sm:$0xff]
    %v101 = vld [vmem:[#allocation3 + $0x1a8] sm:$0xff]
    %v102 = vld [vmem:[#allocation3 + $0x1b0] sm:$0xff]
    %v103 = vld [vmem:[#allocation3 + $0x1b8] sm:$0xff]
    %v104 = vld [vmem:[#allocation3 + $0x1c0] sm:$0xff]
    %v105 = vld [vmem:[#allocation3 + $0x1c8] sm:$0xff]
    %v106 = vld [vmem:[#allocation3 + $0x1d0] sm:$0xff]
    %v107 = vld [vmem:[#allocation3 + $0x1d8] sm:$0xff]
    %v108 = vld [vmem:[#allocation3 + $0x1e0] sm:$0xff]
    %v109 = vld [vmem:[#allocation3 + $0x1e8] sm:$0xff]
    %v110 = vld [vmem:[#allocation3 + $0x1f0] sm:$0xff]
    %v111 = vld [vmem:[#allocation3 + $0x1f8] sm:$0xff]
    %v112 = vld [vmem:[#allocation3 + $0x200] sm:$0xff]
    %v113 = vld [vmem:[#allocation3 + $0x208] sm:$0xff]
    %v114 = vld [vmem:[#allocation3 + $0x210] sm:$0xff]
    %v115 = vld [vmem:[#allocation3 + $0x218] sm:$0xff]
    %v116 = vld [vmem:[#allocation3 + $0x220] sm:$0xff]
    %v117 = vld [vmem:[#allocation3 + $0x228] sm:$0xff]
    %v118 = vld [vmem:[#allocation3 + $0x230] sm:$0xff]
    %v119 = vld [vmem:[#allocation3 + $0x238] sm:$0xff]
    %v120 = vld [vmem:[#allocation3 + $0x240] sm:$0xff]
    %v121 = vld [vmem:[#allocation3 + $0x248] sm:$0xff]
    %v122 = vld [vmem:[#allocation3 + $0x250] sm:$0xff]
    %v123 = vld [vmem:[#allocation3 + $0x258] sm:$0xff]
    %v124 = vld [vmem:[#allocation3 + $0x260] sm:$0xff]
    %v125 = vld [vmem:[#allocation3 + $0x268] sm:$0xff]
    %v126 = vld [vmem:[#allocation3 + $0x270] sm:$0xff]
    %v127 = vld [vmem:[#allocation3 + $0x278] sm:$0xff]
    %v128 = vld [vmem:[#allocation3 + $0x280] sm:$0xff]
    %v129 = vld [vmem:[#allocation3 + $0x288] sm:$0xff]
    %v130 = vld [vmem:[#allocation3 + $0x290] sm:$0xff]
    %v131 = vld [vmem:[#allocation3 + $0x298] sm:$0xff]
    %v132 = vld [vmem:[#allocation3 + $0x2a0] sm:$0xff]
    %v133 = vld [vmem:[#allocation3 + $0x2a8] sm:$0xff]
    %v134 = vld [vmem:[#allocation3 + $0x2b0] sm:$0xff]
    %v135 = vld [vmem:[#allocation3 + $0x2b8] sm:$0xff]
    %v136 = vld [vmem:[#allocation3 + $0x2c0] sm:$0xff]
    %v137 = vld [vmem:[#allocation3 + $0x2c8] sm:$0xff]
    %v138 = vld [vmem:[#allocation3 + $0x2d0] sm:$0xff]
    %v139 = vld [vmem:[#allocation3 + $0x2d8] sm:$0xff]
    %v140 = vld [vmem:[#allocation3 + $0x2e0] sm:$0xff]
    %v141 = vld [vmem:[#allocation3 + $0x2e8] sm:$0xff]
    %v142 = vld [vmem:[#allocation3 + $0x2f0] sm:$0xff]
    %v143 = vld [vmem:[#allocation3 + $0x2f8] sm:$0xff]
    %v240 = vunpack.c.l.b16 %v48
    %v241 = vunpack.c.h.b16 %v48
    %v242 = vunpack.c.l.b16 %v49
    %v243 = vunpack.c.h.b16 %v49
    %v244 = vunpack.c.l.b16 %v50
    %v245 = vunpack.c.h.b16 %v50
    %v246 = vunpack.c.l.b16 %v51
    %v247 = vunpack.c.h.b16 %v51
    %v248 = vunpack.c.l.b16 %v52
    %v249 = vunpack.c.h.b16 %v52
    %v250 = vunpack.c.l.b16 %v53
    %v251 = vunpack.c.h.b16 %v53
    %v252 = vunpack.c.l.b16 %v54
    %v253 = vunpack.c.h.b16 %v54
    %v254 = vunpack.c.l.b16 %v55
    %v255 = vunpack.c.h.b16 %v55
    %v256 = vunpack.c.l.b16 %v56
    %v257 = vunpack.c.h.b16 %v56
    %v258 = vunpack.c.l.b16 %v57
    %v259 = vunpack.c.h.b16 %v57
    %v260 = vunpack.c.l.b16 %v58
    %v261 = vunpack.c.h.b16 %v58
    %v262 = vunpack.c.l.b16 %v59
    %v263 = vunpack.c.h.b16 %v59
    %v264 = vunpack.c.l.b16 %v60
    %v265 = vunpack.c.h.b16 %v60
    %v266 = vunpack.c.l.b16 %v61
    %v267 = vunpack.c.h.b16 %v61
    %v268 = vunpack.c.l.b16 %v62
    %v269 = vunpack.c.h.b16 %v62
    %v270 = vunpack.c.l.b16 %v63
    %v271 = vunpack.c.h.b16 %v63
    %v272 = vunpack.c.l.b16 %v64
    %v273 = vunpack.c.h.b16 %v64
    %v274 = vunpack.c.l.b16 %v65
    %v275 = vunpack.c.h.b16 %v65
    %v276 = vunpack.c.l.b16 %v66
    %v277 = vunpack.c.h.b16 %v66
    %v278 = vunpack.c.l.b16 %v67
    %v279 = vunpack.c.h.b16 %v67
    %v280 = vunpack.c.l.b16 %v68
    %v281 = vunpack.c.h.b16 %v68
    %v282 = vunpack.c.l.b16 %v69
    %v283 = vunpack.c.h.b16 %v69
    %v284 = vunpack.c.l.b16 %v70
    %v285 = vunpack.c.h.b16 %v70
    %v286 = vunpack.c.l.b16 %v71
    %v287 = vunpack.c.h.b16 %v71
    %v288 = vunpack.c.l.b16 %v72
    %v289 = vunpack.c.h.b16 %v72
    %v290 = vunpack.c.l.b16 %v73
    %v291 = vunpack.c.h.b16 %v73
    %v292 = vunpack.c.l.b16 %v74
    %v293 = vunpack.c.h.b16 %v74
    %v294 = vunpack.c.l.b16 %v75
    %v295 = vunpack.c.h.b16 %v75
    %v296 = vunpack.c.l.b16 %v76
    %v297 = vunpack.c.h.b16 %v76
    %v298 = vunpack.c.l.b16 %v77
    %v299 = vunpack.c.h.b16 %v77
    %v300 = vunpack.c.l.b16 %v78
    %v301 = vunpack.c.h.b16 %v78
    %v302 = vunpack.c.l.b16 %v79
    %v303 = vunpack.c.h.b16 %v79
    %v304 = vunpack.c.l.b16 %v80
    %v305 = vunpack.c.h.b16 %v80
    %v306 = vunpack.c.l.b16 %v81
    %v307 = vunpack.c.h.b16 %v81
    %v308 = vunpack.c.l.b16 %v82
    %v309 = vunpack.c.h.b16 %v82
    %v310 = vunpack.c.l.b16 %v83
    %v311 = vunpack.c.h.b16 %v83
    %v312 = vunpack.c.l.b16 %v84
    %v313 = vunpack.c.h.b16 %v84
    %v314 = vunpack.c.l.b16 %v85
    %v315 = vunpack.c.h.b16 %v85
    %v316 = vunpack.c.l.b16 %v86
    %v317 = vunpack.c.h.b16 %v86
    %v318 = vunpack.c.l.b16 %v87
    %v319 = vunpack.c.h.b16 %v87
    %v320 = vunpack.c.l.b16 %v88
    %v321 = vunpack.c.h.b16 %v88
    %v322 = vunpack.c.l.b16 %v89
    %v323 = vunpack.c.h.b16 %v89
    %v324 = vunpack.c.l.b16 %v90
    %v325 = vunpack.c.h.b16 %v90
    %v326 = vunpack.c.l.b16 %v91
    %v327 = vunpack.c.h.b16 %v91
    %v328 = vunpack.c.l.b16 %v92
    %v329 = vunpack.c.h.b16 %v92
    %v330 = vunpack.c.l.b16 %v93
    %v331 = vunpack.c.h.b16 %v93
    %v332 = vunpack.c.l.b16 %v94
    %v333 = vunpack.c.h.b16 %v94
    %v334 = vunpack.c.l.b16 %v95
    %v335 = vunpack.c.h.b16 %v95
    %v336 = vunpack.c.l.b16 %v96
    %v337 = vunpack.c.h.b16 %v96
    %v338 = vunpack.c.l.b16 %v97
    %v339 = vunpack.c.h.b16 %v97
    %v340 = vunpack.c.l.b16 %v98
    %v341 = vunpack.c.h.b16 %v98
    %v342 = vunpack.c.l.b16 %v99
    %v343 = vunpack.c.h.b16 %v99
    %v344 = vunpack.c.l.b16 %v100
    %v345 = vunpack.c.h.b16 %v100
    %v346 = vunpack.c.l.b16 %v101
    %v347 = vunpack.c.h.b16 %v101
    %v348 = vunpack.c.l.b16 %v102
    %v349 = vunpack.c.h.b16 %v102
    %v350 = vunpack.c.l.b16 %v103
    %v351 = vunpack.c.h.b16 %v103
    %v352 = vunpack.c.l.b16 %v104
    %v353 = vunpack.c.h.b16 %v104
    %v354 = vunpack.c.l.b16 %v105
    %v355 = vunpack.c.h.b16 %v105
    %v356 = vunpack.c.l.b16 %v106
    %v357 = vunpack.c.h.b16 %v106
    %v358 = vunpack.c.l.b16 %v107
    %v359 = vunpack.c.h.b16 %v107
    %v360 = vunpack.c.l.b16 %v108
    %v361 = vunpack.c.h.b16 %v108
    %v362 = vunpack.c.l.b16 %v109
    %v363 = vunpack.c.h.b16 %v109
    %v364 = vunpack.c.l.b16 %v110
    %v365 = vunpack.c.h.b16 %v110
    %v366 = vunpack.c.l.b16 %v111
    %v367 = vunpack.c.h.b16 %v111
    %v368 = vunpack.c.l.b16 %v112
    %v369 = vunpack.c.h.b16 %v112
    %v370 = vunpack.c.l.b16 %v113
    %v371 = vunpack.c.h.b16 %v113
    %v372 = vunpack.c.l.b16 %v114
    %v373 = vunpack.c.h.b16 %v114
    %v374 = vunpack.c.l.b16 %v115
    %v375 = vunpack.c.h.b16 %v115
    %v376 = vunpack.c.l.b16 %v116
    %v377 = vunpack.c.h.b16 %v116
    %v378 = vunpack.c.l.b16 %v117
    %v379 = vunpack.c.h.b16 %v117
    %v380 = vunpack.c.l.b16 %v118
    %v381 = vunpack.c.h.b16 %v118
    %v382 = vunpack.c.l.b16 %v119
    %v383 = vunpack.c.h.b16 %v119
    %v384 = vunpack.c.l.b16 %v120
    %v385 = vunpack.c.h.b16 %v120
    %v386 = vunpack.c.l.b16 %v121
    %v387 = vunpack.c.h.b16 %v121
    %v388 = vunpack.c.l.b16 %v122
    %v389 = vunpack.c.h.b16 %v122
    %v390 = vunpack.c.l.b16 %v123
    %v391 = vunpack.c.h.b16 %v123
    %v392 = vunpack.c.l.b16 %v124
    %v393 = vunpack.c.h.b16 %v124
    %v394 = vunpack.c.l.b16 %v125
    %v395 = vunpack.c.h.b16 %v125
    %v396 = vunpack.c.l.b16 %v126
    %v397 = vunpack.c.h.b16 %v126
    %v398 = vunpack.c.l.b16 %v127
    %v399 = vunpack.c.h.b16 %v127
    %v400 = vunpack.c.l.b16 %v128
    %v401 = vunpack.c.h.b16 %v128
    %v402 = vunpack.c.l.b16 %v129
    %v403 = vunpack.c.h.b16 %v129
    %v404 = vunpack.c.l.b16 %v130
    %v405 = vunpack.c.h.b16 %v130
    %v406 = vunpack.c.l.b16 %v131
    %v407 = vunpack.c.h.b16 %v131
    %v408 = vunpack.c.l.b16 %v132
    %v409 = vunpack.c.h.b16 %v132
    %v410 = vunpack.c.l.b16 %v133
    %v411 = vunpack.c.h.b16 %v133
    %v412 = vunpack.c.l.b16 %v134
    %v413 = vunpack.c.h.b16 %v134
    %v414 = vunpack.c.l.b16 %v135
    %v415 = vunpack.c.h.b16 %v135
    %v416 = vunpack.c.l.b16 %v136
    %v417 = vunpack.c.h.b16 %v136
    %v418 = vunpack.c.l.b16 %v137
    %v419 = vunpack.c.h.b16 %v137
    %v420 = vunpack.c.l.b16 %v138
    %v421 = vunpack.c.h.b16 %v138
    %v422 = vunpack.c.l.b16 %v139
    %v423 = vunpack.c.h.b16 %v139
    %v424 = vunpack.c.l.b16 %v140
    %v425 = vunpack.c.h.b16 %v140
    %v426 = vunpack.c.l.b16 %v141
    %v427 = vunpack.c.h.b16 %v141
    %v428 = vunpack.c.l.b16 %v142
    %v429 = vunpack.c.h.b16 %v142
    %v430 = vunpack.c.l.b16 %v143
    %v431 = vunpack.c.h.b16 %v143
    %v432 = vpack.c.b16 %v244, %v240
    %v433 = vpack.c.b16 %v245, %v241
    %v434 = vpack.c.b16 %v246, %v242
    %v435 = vpack.c.b16 %v247, %v243
    %v436 = vpack.c.b16 %v252, %v248
    %v437 = vpack.c.b16 %v253, %v249
    %v438 = vpack.c.b16 %v254, %v250
    %v439 = vpack.c.b16 %v255, %v251
    %v440 = vpack.c.b16 %v260, %v256
    %v441 = vpack.c.b16 %v261, %v257
    %v442 = vpack.c.b16 %v262, %v258
    %v443 = vpack.c.b16 %v263, %v259
    %v444 = vpack.c.b16 %v268, %v264
    %v445 = vpack.c.b16 %v269, %v265
    %v446 = vpack.c.b16 %v270, %v266
    %v447 = vpack.c.b16 %v271, %v267
    %v448 = vpack.c.b16 %v276, %v272
    %v449 = vpack.c.b16 %v277, %v273
    %v450 = vpack.c.b16 %v278, %v274
    %v451 = vpack.c.b16 %v279, %v275
    %v452 = vpack.c.b16 %v284, %v280
    %v453 = vpack.c.b16 %v285, %v281
    %v454 = vpack.c.b16 %v286, %v282
    %v455 = vpack.c.b16 %v287, %v283
    %v456 = vpack.c.b16 %v292, %v288
    %v457 = vpack.c.b16 %v293, %v289
    %v458 = vpack.c.b16 %v294, %v290
    %v459 = vpack.c.b16 %v295, %v291
    %v460 = vpack.c.b16 %v300, %v296
    %v461 = vpack.c.b16 %v301, %v297
    %v462 = vpack.c.b16 %v302, %v298
    %v463 = vpack.c.b16 %v303, %v299
    %v464 = vpack.c.b16 %v308, %v304
    %v465 = vpack.c.b16 %v309, %v305
    %v466 = vpack.c.b16 %v310, %v306
    %v467 = vpack.c.b16 %v311, %v307
    %v468 = vpack.c.b16 %v316, %v312
    %v469 = vpack.c.b16 %v317, %v313
    %v470 = vpack.c.b16 %v318, %v314
    %v471 = vpack.c.b16 %v319, %v315
    %v472 = vpack.c.b16 %v324, %v320
    %v473 = vpack.c.b16 %v325, %v321
    %v474 = vpack.c.b16 %v326, %v322
    %v475 = vpack.c.b16 %v327, %v323
    %v476 = vpack.c.b16 %v332, %v328
    %v477 = vpack.c.b16 %v333, %v329
    %v478 = vpack.c.b16 %v334, %v330
    %v479 = vpack.c.b16 %v335, %v331
    %v480 = vpack.c.b16 %v340, %v336
    %v481 = vpack.c.b16 %v341, %v337
    %v482 = vpack.c.b16 %v342, %v338
    %v483 = vpack.c.b16 %v343, %v339
    %v484 = vpack.c.b16 %v348, %v344
    %v485 = vpack.c.b16 %v349, %v345
    %v486 = vpack.c.b16 %v350, %v346
    %v487 = vpack.c.b16 %v351, %v347
    %v488 = vpack.c.b16 %v356, %v352
    %v489 = vpack.c.b16 %v357, %v353
    %v490 = vpack.c.b16 %v358, %v354
    %v491 = vpack.c.b16 %v359, %v355
    %v492 = vpack.c.b16 %v364, %v360
    %v493 = vpack.c.b16 %v365, %v361
    %v494 = vpack.c.b16 %v366, %v362
    %v495 = vpack.c.b16 %v367, %v363
    %v496 = vpack.c.b16 %v372, %v368
    %v497 = vpack.c.b16 %v373, %v369
    %v498 = vpack.c.b16 %v374, %v370
    %v499 = vpack.c.b16 %v375, %v371
    %v500 = vpack.c.b16 %v380, %v376
    %v501 = vpack.c.b16 %v381, %v377
    %v502 = vpack.c.b16 %v382, %v378
    %v503 = vpack.c.b16 %v383, %v379
    %v504 = vpack.c.b16 %v388, %v384
    %v505 = vpack.c.b16 %v389, %v385
    %v506 = vpack.c.b16 %v390, %v386
    %v507 = vpack.c.b16 %v391, %v387
    %v508 = vpack.c.b16 %v396, %v392
    %v509 = vpack.c.b16 %v397, %v393
    %v510 = vpack.c.b16 %v398, %v394
    %v511 = vpack.c.b16 %v399, %v395
    %v512 = vpack.c.b16 %v404, %v400
    %v513 = vpack.c.b16 %v405, %v401
    %v514 = vpack.c.b16 %v406, %v402
    %v515 = vpack.c.b16 %v407, %v403
    %v516 = vpack.c.b16 %v412, %v408
    %v517 = vpack.c.b16 %v413, %v409
    %v518 = vpack.c.b16 %v414, %v410
    %v519 = vpack.c.b16 %v415, %v411
    %v520 = vpack.c.b16 %v420, %v416
    %v521 = vpack.c.b16 %v421, %v417
    %v522 = vpack.c.b16 %v422, %v418
    %v523 = vpack.c.b16 %v423, %v419
    %v524 = vpack.c.b16 %v428, %v424
    %v525 = vpack.c.b16 %v429, %v425
    %v526 = vpack.c.b16 %v430, %v426
    %v527 = vpack.c.b16 %v431, %v427
    %624 = vmatprep.subr.bf16.mxu0 %v461
    %625 = vmatpush1.bf16.msra.mxu0 %v460
    %626 = vmatprep.subr.bf16.mxu0 %v457
    %627 = vmatpush1.bf16.msra.mxu0 %v456
    %628 = vmatprep.subr.bf16.mxu0 %v453
    %629 = vmatpush1.bf16.msra.mxu0 %v452
    %630 = vmatprep.subr.bf16.mxu0 %v449
    %631 = vmatpush1.bf16.msra.mxu0 %v448
    %632 = vmatprep.subr.bf16.mxu0 %v445
    %633 = vmatpush1.bf16.msra.mxu0 %v444
    %634 = vmatprep.subr.bf16.mxu0 %v441
    %635 = vmatpush1.bf16.msra.mxu0 %v440
    %636 = vmatprep.subr.bf16.mxu0 %v437
    %637 = vmatpush1.bf16.msra.mxu0 %v436
    %638 = vmatprep.subr.bf16.mxu0 %v433
    %639 = vmatpush1.bf16.msra.mxu0 %v432
    %640 = vmatprep.subr.bf16.mxu0 %v493
    %641 = vmatpush2.bf16.msra.mxu0 %v492
    %642 = vmatprep.subr.bf16.mxu0 %v489
    %643 = vmatpush2.bf16.msra.mxu0 %v488
    %644 = vmatprep.subr.bf16.mxu0 %v485
    %645 = vmatpush2.bf16.msra.mxu0 %v484
    %646 = vmatprep.subr.bf16.mxu0 %v481
    %647 = vmatpush2.bf16.msra.mxu0 %v480
    %648 = vmatprep.subr.bf16.mxu0 %v477
    %649 = vmatpush2.bf16.msra.mxu0 %v476
    %650 = vmatprep.subr.bf16.mxu0 %v473
    %651 = vmatpush2.bf16.msra.mxu0 %v472
    %652 = vmatprep.subr.bf16.mxu0 %v469
    %653 = vmatpush2.bf16.msra.mxu0 %v468
    %654 = vmatprep.subr.bf16.mxu0 %v465
    %655 = vmatpush2.bf16.msra.mxu0 %v464
    %656 = vmatprep.mubr.bf16.mxu0 %v46
    %657 = vmatmul.mubr.bf16.gmra.mxu0 %v45
    %v658 = vpop.f32.mrf.mxu0
    %v659 = vadd.f32 0.0, %v658
    %v660 = vpop.f32.mrf.mxu0
    %v661 = vadd.f32 0.0, %v660
    %v662 = vpop.f32.mrf.mxu0
    %v663 = vpop.f32.mrf.mxu0
    %664 = vdwg.mxu0
    %665 = vmatprep.subr.bf16.mxu0 %v525
    %666 = vmatpush1.bf16.msra.mxu0 %v524
    %667 = vmatprep.subr.bf16.mxu0 %v521
    %668 = vmatpush1.bf16.msra.mxu0 %v520
    %669 = vmatprep.subr.bf16.mxu0 %v517
    %670 = vmatpush1.bf16.msra.mxu0 %v516
    %671 = vmatprep.subr.bf16.mxu0 %v513
    %672 = vmatpush1.bf16.msra.mxu0 %v512
    %673 = vmatprep.subr.bf16.mxu0 %v509
    %674 = vmatpush1.bf16.msra.mxu0 %v508
    %675 = vmatprep.subr.bf16.mxu0 %v505
    %676 = vmatpush1.bf16.msra.mxu0 %v504
    %677 = vmatprep.subr.bf16.mxu0 %v501
    %678 = vmatpush1.bf16.msra.mxu0 %v500
    %679 = vmatprep.subr.bf16.mxu0 %v497
    %680 = vmatpush1.bf16.msra.mxu0 %v496
    %681 = vmatprep.subr.bf16.mxu0 0
    %682 = vmatpush2.bf16.msra.mxu0 0
    %683 = vmatprep.subr.bf16.mxu0 0
    %684 = vmatpush2.bf16.msra.mxu0 0
    %685 = vmatprep.subr.bf16.mxu0 0
    %686 = vmatpush2.bf16.msra.mxu0 0
    %687 = vmatprep.subr.bf16.mxu0 0
    %688 = vmatpush2.bf16.msra.mxu0 0
    %689 = vmatprep.subr.bf16.mxu0 0
    %690 = vmatpush2.bf16.msra.mxu0 0
    %691 = vmatprep.subr.bf16.mxu0 0
    %692 = vmatpush2.bf16.msra.mxu0 0
    %693 = vmatprep.subr.bf16.mxu0 0
    %694 = vmatpush2.bf16.msra.mxu0 0
    %695 = vmatprep.subr.bf16.mxu0 0
    %696 = vmatpush2.bf16.msra.mxu0 0
    %697 = vmatprep.mubr.bf16.mxu0 0
    %698 = vmatmul.mubr.bf16.gmra.mxu0 %v47
    %v699 = vpop.f32.mrf.mxu0
    %v700 = vadd.f32 %v659, %v699
    %v701 = vpop.f32.mrf.mxu0
    %v702 = vadd.f32 %v661, %v701
    %v703 = vpop.f32.mrf.mxu0
    %v704 = vpop.f32.mrf.mxu0
    %705 = vdwg.mxu0
    %706 = vmatprep.subr.bf16.mxu0 %v463
    %707 = vmatpush1.bf16.msra.mxu0 %v462
    %708 = vmatprep.subr.bf16.mxu0 %v459
    %709 = vmatpush1.bf16.msra.mxu0 %v458
    %710 = vmatprep.subr.bf16.mxu0 %v455
    %711 = vmatpush1.bf16.msra.mxu0 %v454
    %712 = vmatprep.subr.bf16.mxu0 %v451
    %713 = vmatpush1.bf16.msra.mxu0 %v450
    %714 = vmatprep.subr.bf16.mxu0 %v447
    %715 = vmatpush1.bf16.msra.mxu0 %v446
    %716 = vmatprep.subr.bf16.mxu0 %v443
    %717 = vmatpush1.bf16.msra.mxu0 %v442
    %718 = vmatprep.subr.bf16.mxu0 %v439
    %719 = vmatpush1.bf16.msra.mxu0 %v438
    %720 = vmatprep.subr.bf16.mxu0 %v435
    %721 = vmatpush1.bf16.msra.mxu0 %v434
    %722 = vmatprep.subr.bf16.mxu0 %v495
    %723 = vmatpush2.bf16.msra.mxu0 %v494
    %724 = vmatprep.subr.bf16.mxu0 %v491
    %725 = vmatpush2.bf16.msra.mxu0 %v490
    %726 = vmatprep.subr.bf16.mxu0 %v487
    %727 = vmatpush2.bf16.msra.mxu0 %v486
    %728 = vmatprep.subr.bf16.mxu0 %v483
    %729 = vmatpush2.bf16.msra.mxu0 %v482
    %730 = vmatprep.subr.bf16.mxu0 %v479
    %731 = vmatpush2.bf16.msra.mxu0 %v478
    %732 = vmatprep.subr.bf16.mxu0 %v475
    %733 = vmatpush2.bf16.msra.mxu0 %v474
    %734 = vmatprep.subr.bf16.mxu0 %v471
    %735 = vmatpush2.bf16.msra.mxu0 %v470
    %736 = vmatprep.subr.bf16.mxu0 %v467
    %737 = vmatpush2.bf16.msra.mxu0 %v466
    %738 = vmatprep.mubr.bf16.mxu0 %v46
    %739 = vmatmul.mubr.bf16.gmra.mxu0 %v45
    %v740 = vpop.f32.mrf.mxu0
    %v741 = vadd.f32 0.0, %v740
    %v742 = vpop.f32.mrf.mxu0
    %v743 = vadd.f32 0.0, %v742
    %v744 = vpop.f32.mrf.mxu0
    %v745 = vpop.f32.mrf.mxu0
    %746 = vdwg.mxu0
    %747 = vmatprep.subr.bf16.mxu0 %v527
    %748 = vmatpush1.bf16.msra.mxu0 %v526
    %749 = vmatprep.subr.bf16.mxu0 %v523
    %750 = vmatpush1.bf16.msra.mxu0 %v522
    %751 = vmatprep.subr.bf16.mxu0 %v519
    %752 = vmatpush1.bf16.msra.mxu0 %v518
    %753 = vmatprep.subr.bf16.mxu0 %v515
    %754 = vmatpush1.bf16.msra.mxu0 %v514
    %755 = vmatprep.subr.bf16.mxu0 %v511
    %756 = vmatpush1.bf16.msra.mxu0 %v510
    %757 = vmatprep.subr.bf16.mxu0 %v507
    %758 = vmatpush1.bf16.msra.mxu0 %v506
    %759 = vmatprep.subr.bf16.mxu0 %v503
    %760 = vmatpush1.bf16.msra.mxu0 %v502
    %761 = vmatprep.subr.bf16.mxu0 %v499
    %762 = vmatpush1.bf16.msra.mxu0 %v498
    %763 = vmatprep.subr.bf16.mxu0 0
    %764 = vmatpush2.bf16.msra.mxu0 0
    %765 = vmatprep.subr.bf16.mxu0 0
    %766 = vmatpush2.bf16.msra.mxu0 0
    %767 = vmatprep.subr.bf16.mxu0 0
    %768 = vmatpush2.bf16.msra.mxu0 0
    %769 = vmatprep.subr.bf16.mxu0 0
    %770 = vmatpush2.bf16.msra.mxu0 0
    %771 = vmatprep.subr.bf16.mxu0 0
    %772 = vmatpush2.bf16.msra.mxu0 0
    %773 = vmatprep.subr.bf16.mxu0 0
    %774 = vmatpush2.bf16.msra.mxu0 0
    %775 = vmatprep.subr.bf16.mxu0 0
    %776 = vmatpush2.bf16.msra.mxu0 0
    %777 = vmatprep.subr.bf16.mxu0 0
    %778 = vmatpush2.bf16.msra.mxu0 0
    %779 = vmatprep.mubr.bf16.mxu0 0
    %780 = vmatmul.mubr.bf16.gmra.mxu0 %v47
    %v781 = vpop.f32.mrf.mxu0
    %v782 = vadd.f32 %v741, %v781
    %v783 = vpop.f32.mrf.mxu0
    %v784 = vadd.f32 %v743, %v783
    %v785 = vpop.f32.mrf.mxu0
    %v786 = vpop.f32.mrf.mxu0
    %787 = vdwg.mxu0
    %v788 = vxor.u32 %v700, 2147483648
    %v789 = vxor.u32 %v702, 2147483648
    %v790 = vxor.u32 %v782, 2147483648
    %v791 = vmul.f32 %v788, 1.442695
    %v792 = vpow.pop %v791
    %v793 = vmul.f32 %v789, 1.442695
    %v794 = vpow.pop %v793
    %v795 = vmul.f32 %v790, 1.442695
    %v796 = vpow.pop %v795
    %v797 = vadd.f32 %v792, 1.0
    %v798 = vadd.f32 %v794, 1.0
    %v799 = vadd.f32 %v796, 1.0
    %v800 = vrcp.pop %v797
    %v801 = vmul.f32 1.0, %v800
    %v802 = vrcp.pop %v798
    %v803 = vmul.f32 1.0, %v802
    %v804 = vrcp.pop %v799
    %v805 = vmul.f32 1.0, %v804
    %v806 = vtanh.pop %v784
    %v807 = vld [vmem:[%s2] sm:$0xff]
    %v808 = vmul.f32 %v803, %v807
    %v809 = vmul.f32 %v801, %v806
    %v810 = vadd.f32 %v808, %v809
    %v811 = vtanh.pop %v810
    %v812 = vmul.f32 %v805, %v811
    %813 = vst [vmem:[%s4] sm:$0xff] %v812
    %814 = vst [vmem:[%s5] sm:$0xff] %v810
    %815 = vst [vmem:[#allocation2] sm:$0xff] %v812
    %s816 = scalar_lea.vmem %s1, 8
    %v817 = vld [vmem:[%s816] sm:$0xff]
    %818 = vst [vmem:[#allocation2 + $0x8] sm:$0xff] %v817
    %v819 = vld [vmem:[#allocation2] sm:$0xff]
    %v820 = vld [vmem:[#allocation2 + $0x8] sm:$0xff]
    %v821 = vld [vmem:[#allocation2 + $0x10] sm:$0xff]
    %v822 = vpack.c.bf16 %v819, %v819
    %v823 = vpack.c.bf16 %v820, %v820
    %v824 = vpack.c.bf16 %v821, %v821
    %s825 = scalar_lea.vmem [#allocation3], 768
    %v826 = vld [vmem:[%s825] sm:$0xff]
    %v827 = vld [vmem:[%s825 + $0x8] sm:$0xff]
    %v828 = vld [vmem:[%s825 + $0x10] sm:$0xff]
    %v829 = vld [vmem:[%s825 + $0x18] sm:$0xff]
    %v830 = vld [vmem:[%s825 + $0x20] sm:$0xff]
    %v831 = vld [vmem:[%s825 + $0x28] sm:$0xff]
    %v832 = vld [vmem:[%s825 + $0x30] sm:$0xff]
    %v833 = vld [vmem:[%s825 + $0x38] sm:$0xff]
    %v834 = vld [vmem:[%s825 + $0x40] sm:$0xff]
    %v835 = vld [vmem:[%s825 + $0x48] sm:$0xff]
    %v836 = vld [vmem:[%s825 + $0x50] sm:$0xff]
    %v837 = vld [vmem:[%s825 + $0x58] sm:$0xff]
    %v838 = vld [vmem:[%s825 + $0x60] sm:$0xff]
    %v839 = vld [vmem:[%s825 + $0x68] sm:$0xff]
    %v840 = vld [vmem:[%s825 + $0x70] sm:$0xff]
    %v841 = vld [vmem:[%s825 + $0x78] sm:$0xff]
    %v842 = vld [vmem:[%s825 + $0x80] sm:$0xff]
    %v843 = vld [vmem:[%s825 + $0x88] sm:$0xff]
    %v844 = vld [vmem:[%s825 + $0x90] sm:$0xff]
    %v845 = vld [vmem:[%s825 + $0x98] sm:$0xff]
    %v846 = vld [vmem:[%s825 + $0xa0] sm:$0xff]
    %v847 = vld [vmem:[%s825 + $0xa8] sm:$0xff]
    %v848 = vld [vmem:[%s825 + $0xb0] sm:$0xff]
    %v849 = vld [vmem:[%s825 + $0xb8] sm:$0xff]
    %v850 = vld [vmem:[%s825 + $0xc0] sm:$0xff]
    %v851 = vld [vmem:[%s825 + $0xc8] sm:$0xff]
    %v852 = vld [vmem:[%s825 + $0xd0] sm:$0xff]
    %v853 = vld [vmem:[%s825 + $0xd8] sm:$0xff]
    %v854 = vld [vmem:[%s825 + $0xe0] sm:$0xff]
    %v855 = vld [vmem:[%s825 + $0xe8] sm:$0xff]
    %v856 = vld [vmem:[%s825 + $0xf0] sm:$0xff]
    %v857 = vld [vmem:[%s825 + $0xf8] sm:$0xff]
    %v858 = vld [vmem:[%s825 + $0x100] sm:$0xff]
    %v859 = vld [vmem:[%s825 + $0x108] sm:$0xff]
    %v860 = vld [vmem:[%s825 + $0x110] sm:$0xff]
    %v861 = vld [vmem:[%s825 + $0x118] sm:$0xff]
    %v862 = vld [vmem:[%s825 + $0x120] sm:$0xff]
    %v863 = vld [vmem:[%s825 + $0x128] sm:$0xff]
    %v864 = vld [vmem:[%s825 + $0x130] sm:$0xff]
    %v865 = vld [vmem:[%s825 + $0x138] sm:$0xff]
    %v866 = vld [vmem:[%s825 + $0x140] sm:$0xff]
    %v867 = vld [vmem:[%s825 + $0x148] sm:$0xff]
    %v868 = vld [vmem:[%s825 + $0x150] sm:$0xff]
    %v869 = vld [vmem:[%s825 + $0x158] sm:$0xff]
    %v870 = vld [vmem:[%s825 + $0x160] sm:$0xff]
    %v871 = vld [vmem:[%s825 + $0x168] sm:$0xff]
    %v872 = vld [vmem:[%s825 + $0x170] sm:$0xff]
    %v873 = vld [vmem:[%s825 + $0x178] sm:$0xff]
    %v874 = vld [vmem:[%s825 + $0x180] sm:$0xff]
    %v875 = vld [vmem:[%s825 + $0x188] sm:$0xff]
    %v876 = vld [vmem:[%s825 + $0x190] sm:$0xff]
    %v877 = vld [vmem:[%s825 + $0x198] sm:$0xff]
    %v878 = vld [vmem:[%s825 + $0x1a0] sm:$0xff]
    %v879 = vld [vmem:[%s825 + $0x1a8] sm:$0xff]
    %v880 = vld [vmem:[%s825 + $0x1b0] sm:$0xff]
    %v881 = vld [vmem:[%s825 + $0x1b8] sm:$0xff]
    %v882 = vld [vmem:[%s825 + $0x1c0] sm:$0xff]
    %v883 = vld [vmem:[%s825 + $0x1c8] sm:$0xff]
    %v884 = vld [vmem:[%s825 + $0x1d0] sm:$0xff]
    %v885 = vld [vmem:[%s825 + $0x1d8] sm:$0xff]
    %v886 = vld [vmem:[%s825 + $0x1e0] sm:$0xff]
    %v887 = vld [vmem:[%s825 + $0x1e8] sm:$0xff]
    %v888 = vld [vmem:[%s825 + $0x1f0] sm:$0xff]
    %v889 = vld [vmem:[%s825 + $0x1f8] sm:$0xff]
    %v890 = vld [vmem:[%s825 + $0x200] sm:$0xff]
    %v891 = vld [vmem:[%s825 + $0x208] sm:$0xff]
    %v892 = vld [vmem:[%s825 + $0x210] sm:$0xff]
    %v893 = vld [vmem:[%s825 + $0x218] sm:$0xff]
    %v894 = vld [vmem:[%s825 + $0x220] sm:$0xff]
    %v895 = vld [vmem:[%s825 + $0x228] sm:$0xff]
    %v896 = vld [vmem:[%s825 + $0x230] sm:$0xff]
    %v897 = vld [vmem:[%s825 + $0x238] sm:$0xff]
    %v898 = vld [vmem:[%s825 + $0x240] sm:$0xff]
    %v899 = vld [vmem:[%s825 + $0x248] sm:$0xff]
    %v900 = vld [vmem:[%s825 + $0x250] sm:$0xff]
    %v901 = vld [vmem:[%s825 + $0x258] sm:$0xff]
    %v902 = vld [vmem:[%s825 + $0x260] sm:$0xff]
    %v903 = vld [vmem:[%s825 + $0x268] sm:$0xff]
    %v904 = vld [vmem:[%s825 + $0x270] sm:$0xff]
    %v905 = vld [vmem:[%s825 + $0x278] sm:$0xff]
    %v906 = vld [vmem:[%s825 + $0x280] sm:$0xff]
    %v907 = vld [vmem:[%s825 + $0x288] sm:$0xff]
    %v908 = vld [vmem:[%s825 + $0x290] sm:$0xff]
    %v909 = vld [vmem:[%s825 + $0x298] sm:$0xff]
    %v910 = vld [vmem:[%s825 + $0x2a0] sm:$0xff]
    %v911 = vld [vmem:[%s825 + $0x2a8] sm:$0xff]
    %v912 = vld [vmem:[%s825 + $0x2b0] sm:$0xff]
    %v913 = vld [vmem:[%s825 + $0x2b8] sm:$0xff]
    %v914 = vld [vmem:[%s825 + $0x2c0] sm:$0xff]
    %v915 = vld [vmem:[%s825 + $0x2c8] sm:$0xff]
    %v916 = vld [vmem:[%s825 + $0x2d0] sm:$0xff]
    %v917 = vld [vmem:[%s825 + $0x2d8] sm:$0xff]
    %v918 = vld [vmem:[%s825 + $0x2e0] sm:$0xff]
    %v919 = vld [vmem:[%s825 + $0x2e8] sm:$0xff]
    %v920 = vld [vmem:[%s825 + $0x2f0] sm:$0xff]
    %v921 = vld [vmem:[%s825 + $0x2f8] sm:$0xff]
    %v1018 = vunpack.c.l.b16 %v826
    %v1019 = vunpack.c.h.b16 %v826
    %v1020 = vunpack.c.l.b16 %v827
    %v1021 = vunpack.c.h.b16 %v827
    %v1022 = vunpack.c.l.b16 %v828
    %v1023 = vunpack.c.h.b16 %v828
    %v1024 = vunpack.c.l.b16 %v829
    %v1025 = vunpack.c.h.b16 %v829
    %v1026 = vunpack.c.l.b16 %v830
    %v1027 = vunpack.c.h.b16 %v830
    %v1028 = vunpack.c.l.b16 %v831
    %v1029 = vunpack.c.h.b16 %v831
    %v1030 = vunpack.c.l.b16 %v832
    %v1031 = vunpack.c.h.b16 %v832
    %v1032 = vunpack.c.l.b16 %v833
    %v1033 = vunpack.c.h.b16 %v833
    %v1034 = vunpack.c.l.b16 %v834
    %v1035 = vunpack.c.h.b16 %v834
    %v1036 = vunpack.c.l.b16 %v835
    %v1037 = vunpack.c.h.b16 %v835
    %v1038 = vunpack.c.l.b16 %v836
    %v1039 = vunpack.c.h.b16 %v836
    %v1040 = vunpack.c.l.b16 %v837
    %v1041 = vunpack.c.h.b16 %v837
    %v1042 = vunpack.c.l.b16 %v838
    %v1043 = vunpack.c.h.b16 %v838
    %v1044 = vunpack.c.l.b16 %v839
    %v1045 = vunpack.c.h.b16 %v839
    %v1046 = vunpack.c.l.b16 %v840
    %v1047 = vunpack.c.h.b16 %v840
    %v1048 = vunpack.c.l.b16 %v841
    %v1049 = vunpack.c.h.b16 %v841
    %v1050 = vunpack.c.l.b16 %v842
    %v1051 = vunpack.c.h.b16 %v842
    %v1052 = vunpack.c.l.b16 %v843
    %v1053 = vunpack.c.h.b16 %v843
    %v1054 = vunpack.c.l.b16 %v844
    %v1055 = vunpack.c.h.b16 %v844
    %v1056 = vunpack.c.l.b16 %v845
    %v1057 = vunpack.c.h.b16 %v845
    %v1058 = vunpack.c.l.b16 %v846
    %v1059 = vunpack.c.h.b16 %v846
    %v1060 = vunpack.c.l.b16 %v847
    %v1061 = vunpack.c.h.b16 %v847
    %v1062 = vunpack.c.l.b16 %v848
    %v1063 = vunpack.c.h.b16 %v848
    %v1064 = vunpack.c.l.b16 %v849
    %v1065 = vunpack.c.h.b16 %v849
    %v1066 = vunpack.c.l.b16 %v850
    %v1067 = vunpack.c.h.b16 %v850
    %v1068 = vunpack.c.l.b16 %v851
    %v1069 = vunpack.c.h.b16 %v851
    %v1070 = vunpack.c.l.b16 %v852
    %v1071 = vunpack.c.h.b16 %v852
    %v1072 = vunpack.c.l.b16 %v853
    %v1073 = vunpack.c.h.b16 %v853
    %v1074 = vunpack.c.l.b16 %v854
    %v1075 = vunpack.c.h.b16 %v854
    %v1076 = vunpack.c.l.b16 %v855
    %v1077 = vunpack.c.h.b16 %v855
    %v1078 = vunpack.c.l.b16 %v856
    %v1079 = vunpack.c.h.b16 %v856
    %v1080 = vunpack.c.l.b16 %v857
    %v1081 = vunpack.c.h.b16 %v857
    %v1082 = vunpack.c.l.b16 %v858
    %v1083 = vunpack.c.h.b16 %v858
    %v1084 = vunpack.c.l.b16 %v859
    %v1085 = vunpack.c.h.b16 %v859
    %v1086 = vunpack.c.l.b16 %v860
    %v1087 = vunpack.c.h.b16 %v860
    %v1088 = vunpack.c.l.b16 %v861
    %v1089 = vunpack.c.h.b16 %v861
    %v1090 = vunpack.c.l.b16 %v862
    %v1091 = vunpack.c.h.b16 %v862
    %v1092 = vunpack.c.l.b16 %v863
    %v1093 = vunpack.c.h.b16 %v863
    %v1094 = vunpack.c.l.b16 %v864
    %v1095 = vunpack.c.h.b16 %v864
    %v1096 = vunpack.c.l.b16 %v865
    %v1097 = vunpack.c.h.b16 %v865
    %v1098 = vunpack.c.l.b16 %v866
    %v1099 = vunpack.c.h.b16 %v866
    %v1100 = vunpack.c.l.b16 %v867
    %v1101 = vunpack.c.h.b16 %v867
    %v1102 = vunpack.c.l.b16 %v868
    %v1103 = vunpack.c.h.b16 %v868
    %v1104 = vunpack.c.l.b16 %v869
    %v1105 = vunpack.c.h.b16 %v869
    %v1106 = vunpack.c.l.b16 %v870
    %v1107 = vunpack.c.h.b16 %v870
    %v1108 = vunpack.c.l.b16 %v871
    %v1109 = vunpack.c.h.b16 %v871
    %v1110 = vunpack.c.l.b16 %v872
    %v1111 = vunpack.c.h.b16 %v872
    %v1112 = vunpack.c.l.b16 %v873
    %v1113 = vunpack.c.h.b16 %v873
    %v1114 = vunpack.c.l.b16 %v874
    %v1115 = vunpack.c.h.b16 %v874
    %v1116 = vunpack.c.l.b16 %v875
    %v1117 = vunpack.c.h.b16 %v875
    %v1118 = vunpack.c.l.b16 %v876
    %v1119 = vunpack.c.h.b16 %v876
    %v1120 = vunpack.c.l.b16 %v877
    %v1121 = vunpack.c.h.b16 %v877
    %v1122 = vunpack.c.l.b16 %v878
    %v1123 = vunpack.c.h.b16 %v878
    %v1124 = vunpack.c.l.b16 %v879
    %v1125 = vunpack.c.h.b16 %v879
    %v1126 = vunpack.c.l.b16 %v880
    %v1127 = vunpack.c.h.b16 %v880
    %v1128 = vunpack.c.l.b16 %v881
    %v1129 = vunpack.c.h.b16 %v881
    %v1130 = vunpack.c.l.b16 %v882
    %v1131 = vunpack.c.h.b16 %v882
    %v1132 = vunpack.c.l.b16 %v883
    %v1133 = vunpack.c.h.b16 %v883
    %v1134 = vunpack.c.l.b16 %v884
    %v1135 = vunpack.c.h.b16 %v884
    %v1136 = vunpack.c.l.b16 %v885
    %v1137 = vunpack.c.h.b16 %v885
    %v1138 = vunpack.c.l.b16 %v886
    %v1139 = vunpack.c.h.b16 %v886
    %v1140 = vunpack.c.l.b16 %v887
    %v1141 = vunpack.c.h.b16 %v887
    %v1142 = vunpack.c.l.b16 %v888
    %v1143 = vunpack.c.h.b16 %v888
    %v1144 = vunpack.c.l.b16 %v889
    %v1145 = vunpack.c.h.b16 %v889
    %v1146 = vunpack.c.l.b16 %v890
    %v1147 = vunpack.c.h.b16 %v890
    %v1148 = vunpack.c.l.b16 %v891
    %v1149 = vunpack.c.h.b16 %v891
    %v1150 = vunpack.c.l.b16 %v892
    %v1151 = vunpack.c.h.b16 %v892
    %v1152 = vunpack.c.l.b16 %v893
    %v1153 = vunpack.c.h.b16 %v893
    %v1154 = vunpack.c.l.b16 %v894
    %v1155 = vunpack.c.h.b16 %v894
    %v1156 = vunpack.c.l.b16 %v895
    %v1157 = vunpack.c.h.b16 %v895
    %v1158 = vunpack.c.l.b16 %v896
    %v1159 = vunpack.c.h.b16 %v896
    %v1160 = vunpack.c.l.b16 %v897
    %v1161 = vunpack.c.h.b16 %v897
    %v1162 = vunpack.c.l.b16 %v898
    %v1163 = vunpack.c.h.b16 %v898
    %v1164 = vunpack.c.l.b16 %v899
    %v1165 = vunpack.c.h.b16 %v899
    %v1166 = vunpack.c.l.b16 %v900
    %v1167 = vunpack.c.h.b16 %v900
    %v1168 = vunpack.c.l.b16 %v901
    %v1169 = vunpack.c.h.b16 %v901
    %v1170 = vunpack.c.l.b16 %v902
    %v1171 = vunpack.c.h.b16 %v902
    %v1172 = vunpack.c.l.b16 %v903
    %v1173 = vunpack.c.h.b16 %v903
    %v1174 = vunpack.c.l.b16 %v904
    %v1175 = vunpack.c.h.b16 %v904
    %v1176 = vunpack.c.l.b16 %v905
    %v1177 = vunpack.c.h.b16 %v905
    %v1178 = vunpack.c.l.b16 %v906
    %v1179 = vunpack.c.h.b16 %v906
    %v1180 = vunpack.c.l.b16 %v907
    %v1181 = vunpack.c.h.b16 %v907
    %v1182 = vunpack.c.l.b16 %v908
    %v1183 = vunpack.c.h.b16 %v908
    %v1184 = vunpack.c.l.b16 %v909
    %v1185 = vunpack.c.h.b16 %v909
    %v1186 = vunpack.c.l.b16 %v910
    %v1187 = vunpack.c.h.b16 %v910
    %v1188 = vunpack.c.l.b16 %v911
    %v1189 = vunpack.c.h.b16 %v911
    %v1190 = vunpack.c.l.b16 %v912
    %v1191 = vunpack.c.h.b16 %v912
    %v1192 = vunpack.c.l.b16 %v913
    %v1193 = vunpack.c.h.b16 %v913
    %v1194 = vunpack.c.l.b16 %v914
    %v1195 = vunpack.c.h.b16 %v914
    %v1196 = vunpack.c.l.b16 %v915
    %v1197 = vunpack.c.h.b16 %v915
    %v1198 = vunpack.c.l.b16 %v916
    %v1199 = vunpack.c.h.b16 %v916
    %v1200 = vunpack.c.l.b16 %v917
    %v1201 = vunpack.c.h.b16 %v917
    %v1202 = vunpack.c.l.b16 %v918
    %v1203 = vunpack.c.h.b16 %v918
    %v1204 = vunpack.c.l.b16 %v919
    %v1205 = vunpack.c.h.b16 %v919
    %v1206 = vunpack.c.l.b16 %v920
    %v1207 = vunpack.c.h.b16 %v920
    %v1208 = vunpack.c.l.b16 %v921
    %v1209 = vunpack.c.h.b16 %v921
    %v1210 = vpack.c.b16 %v1022, %v1018
    %v1211 = vpack.c.b16 %v1023, %v1019
    %v1212 = vpack.c.b16 %v1024, %v1020
    %v1213 = vpack.c.b16 %v1025, %v1021
    %v1214 = vpack.c.b16 %v1030, %v1026
    %v1215 = vpack.c.b16 %v1031, %v1027
    %v1216 = vpack.c.b16 %v1032, %v1028
    %v1217 = vpack.c.b16 %v1033, %v1029
    %v1218 = vpack.c.b16 %v1038, %v1034
    %v1219 = vpack.c.b16 %v1039, %v1035
    %v1220 = vpack.c.b16 %v1040, %v1036
    %v1221 = vpack.c.b16 %v1041, %v1037
    %v1222 = vpack.c.b16 %v1046, %v1042
    %v1223 = vpack.c.b16 %v1047, %v1043
    %v1224 = vpack.c.b16 %v1048, %v1044
    %v1225 = vpack.c.b16 %v1049, %v1045
    %v1226 = vpack.c.b16 %v1054, %v1050
    %v1227 = vpack.c.b16 %v1055, %v1051
    %v1228 = vpack.c.b16 %v1056, %v1052
    %v1229 = vpack.c.b16 %v1057, %v1053
    %v1230 = vpack.c.b16 %v1062, %v1058
    %v1231 = vpack.c.b16 %v1063, %v1059
    %v1232 = vpack.c.b16 %v1064, %v1060
    %v1233 = vpack.c.b16 %v1065, %v1061
    %v1234 = vpack.c.b16 %v1070, %v1066
    %v1235 = vpack.c.b16 %v1071, %v1067
    %v1236 = vpack.c.b16 %v1072, %v1068
    %v1237 = vpack.c.b16 %v1073, %v1069
    %v1238 = vpack.c.b16 %v1078, %v1074
    %v1239 = vpack.c.b16 %v1079, %v1075
    %v1240 = vpack.c.b16 %v1080, %v1076
    %v1241 = vpack.c.b16 %v1081, %v1077
    %v1242 = vpack.c.b16 %v1086, %v1082
    %v1243 = vpack.c.b16 %v1087, %v1083
    %v1244 = vpack.c.b16 %v1088, %v1084
    %v1245 = vpack.c.b16 %v1089, %v1085
    %v1246 = vpack.c.b16 %v1094, %v1090
    %v1247 = vpack.c.b16 %v1095, %v1091
    %v1248 = vpack.c.b16 %v1096, %v1092
    %v1249 = vpack.c.b16 %v1097, %v1093
    %v1250 = vpack.c.b16 %v1102, %v1098
    %v1251 = vpack.c.b16 %v1103, %v1099
    %v1252 = vpack.c.b16 %v1104, %v1100
    %v1253 = vpack.c.b16 %v1105, %v1101
    %v1254 = vpack.c.b16 %v1110, %v1106
    %v1255 = vpack.c.b16 %v1111, %v1107
    %v1256 = vpack.c.b16 %v1112, %v1108
    %v1257 = vpack.c.b16 %v1113, %v1109
    %v1258 = vpack.c.b16 %v1118, %v1114
    %v1259 = vpack.c.b16 %v1119, %v1115
    %v1260 = vpack.c.b16 %v1120, %v1116
    %v1261 = vpack.c.b16 %v1121, %v1117
    %v1262 = vpack.c.b16 %v1126, %v1122
    %v1263 = vpack.c.b16 %v1127, %v1123
    %v1264 = vpack.c.b16 %v1128, %v1124
    %v1265 = vpack.c.b16 %v1129, %v1125
    %v1266 = vpack.c.b16 %v1134, %v1130
    %v1267 = vpack.c.b16 %v1135, %v1131
    %v1268 = vpack.c.b16 %v1136, %v1132
    %v1269 = vpack.c.b16 %v1137, %v1133
    %v1270 = vpack.c.b16 %v1142, %v1138
    %v1271 = vpack.c.b16 %v1143, %v1139
    %v1272 = vpack.c.b16 %v1144, %v1140
    %v1273 = vpack.c.b16 %v1145, %v1141
    %v1274 = vpack.c.b16 %v1150, %v1146
    %v1275 = vpack.c.b16 %v1151, %v1147
    %v1276 = vpack.c.b16 %v1152, %v1148
    %v1277 = vpack.c.b16 %v1153, %v1149
    %v1278 = vpack.c.b16 %v1158, %v1154
    %v1279 = vpack.c.b16 %v1159, %v1155
    %v1280 = vpack.c.b16 %v1160, %v1156
    %v1281 = vpack.c.b16 %v1161, %v1157
    %v1282 = vpack.c.b16 %v1166, %v1162
    %v1283 = vpack.c.b16 %v1167, %v1163
    %v1284 = vpack.c.b16 %v1168, %v1164
    %v1285 = vpack.c.b16 %v1169, %v1165
    %v1286 = vpack.c.b16 %v1174, %v1170
    %v1287 = vpack.c.b16 %v1175, %v1171
    %v1288 = vpack.c.b16 %v1176, %v1172
    %v1289 = vpack.c.b16 %v1177, %v1173
    %v1290 = vpack.c.b16 %v1182, %v1178
    %v1291 = vpack.c.b16 %v1183, %v1179
    %v1292 = vpack.c.b16 %v1184, %v1180
    %v1293 = vpack.c.b16 %v1185, %v1181
    %v1294 = vpack.c.b16 %v1190, %v1186
    %v1295 = vpack.c.b16 %v1191, %v1187
    %v1296 = vpack.c.b16 %v1192, %v1188
    %v1297 = vpack.c.b16 %v1193, %v1189
    %v1298 = vpack.c.b16 %v1198, %v1194
    %v1299 = vpack.c.b16 %v1199, %v1195
    %v1300 = vpack.c.b16 %v1200, %v1196
    %v1301 = vpack.c.b16 %v1201, %v1197
    %v1302 = vpack.c.b16 %v1206, %v1202
    %v1303 = vpack.c.b16 %v1207, %v1203
    %v1304 = vpack.c.b16 %v1208, %v1204
    %v1305 = vpack.c.b16 %v1209, %v1205
    %1402 = vmatprep.subr.bf16.mxu0 %v1239
    %1403 = vmatpush1.bf16.msra.mxu0 %v1238
    %1404 = vmatprep.subr.bf16.mxu0 %v1235
    %1405 = vmatpush1.bf16.msra.mxu0 %v1234
    %1406 = vmatprep.subr.bf16.mxu0 %v1231
    %1407 = vmatpush1.bf16.msra.mxu0 %v1230
    %1408 = vmatprep.subr.bf16.mxu0 %v1227
    %1409 = vmatpush1.bf16.msra.mxu0 %v1226
    %1410 = vmatprep.subr.bf16.mxu0 %v1223
    %1411 = vmatpush1.bf16.msra.mxu0 %v1222
    %1412 = vmatprep.subr.bf16.mxu0 %v1219
    %1413 = vmatpush1.bf16.msra.mxu0 %v1218
    %1414 = vmatprep.subr.bf16.mxu0 %v1215
    %1415 = vmatpush1.bf16.msra.mxu0 %v1214
    %1416 = vmatprep.subr.bf16.mxu0 %v1211
    %1417 = vmatpush1.bf16.msra.mxu0 %v1210
    %1418 = vmatprep.subr.bf16.mxu0 %v1271
    %1419 = vmatpush2.bf16.msra.mxu0 %v1270
    %1420 = vmatprep.subr.bf16.mxu0 %v1267
    %1421 = vmatpush2.bf16.msra.mxu0 %v1266
    %1422 = vmatprep.subr.bf16.mxu0 %v1263
    %1423 = vmatpush2.bf16.msra.mxu0 %v1262
    %1424 = vmatprep.subr.bf16.mxu0 %v1259
    %1425 = vmatpush2.bf16.msra.mxu0 %v1258
    %1426 = vmatprep.subr.bf16.mxu0 %v1255
    %1427 = vmatpush2.bf16.msra.mxu0 %v1254
    %1428 = vmatprep.subr.bf16.mxu0 %v1251
    %1429 = vmatpush2.bf16.msra.mxu0 %v1250
    %1430 = vmatprep.subr.bf16.mxu0 %v1247
    %1431 = vmatpush2.bf16.msra.mxu0 %v1246
    %1432 = vmatprep.subr.bf16.mxu0 %v1243
    %1433 = vmatpush2.bf16.msra.mxu0 %v1242
    %1434 = vmatprep.mubr.bf16.mxu0 %v823
    %1435 = vmatmul.mubr.bf16.gmra.mxu0 %v822
    %v1436 = vpop.f32.mrf.mxu0
    %v1437 = vadd.f32 0.0, %v1436
    %v1438 = vpop.f32.mrf.mxu0
    %v1439 = vadd.f32 0.0, %v1438
    %v1440 = vpop.f32.mrf.mxu0
    %v1441 = vpop.f32.mrf.mxu0
    %1442 = vdwg.mxu0
    %1443 = vmatprep.subr.bf16.mxu0 %v1303
    %1444 = vmatpush1.bf16.msra.mxu0 %v1302
    %1445 = vmatprep.subr.bf16.mxu0 %v1299
    %1446 = vmatpush1.bf16.msra.mxu0 %v1298
    %1447 = vmatprep.subr.bf16.mxu0 %v1295
    %1448 = vmatpush1.bf16.msra.mxu0 %v1294
    %1449 = vmatprep.subr.bf16.mxu0 %v1291
    %1450 = vmatpush1.bf16.msra.mxu0 %v1290
    %1451 = vmatprep.subr.bf16.mxu0 %v1287
    %1452 = vmatpush1.bf16.msra.mxu0 %v1286
    %1453 = vmatprep.subr.bf16.mxu0 %v1283
    %1454 = vmatpush1.bf16.msra.mxu0 %v1282
    %1455 = vmatprep.subr.bf16.mxu0 %v1279
    %1456 = vmatpush1.bf16.msra.mxu0 %v1278
    %1457 = vmatprep.subr.bf16.mxu0 %v1275
    %1458 = vmatpush1.bf16.msra.mxu0 %v1274
    %1459 = vmatprep.subr.bf16.mxu0 0
    %1460 = vmatpush2.bf16.msra.mxu0 0
    %1461 = vmatprep.subr.bf16.mxu0 0
    %1462 = vmatpush2.bf16.msra.mxu0 0
    %1463 = vmatprep.subr.bf16.mxu0 0
    %1464 = vmatpush2.bf16.msra.mxu0 0
    %1465 = vmatprep.subr.bf16.mxu0 0
    %1466 = vmatpush2.bf16.msra.mxu0 0
    %1467 = vmatprep.subr.bf16.mxu0 0
    %1468 = vmatpush2.bf16.msra.mxu0 0
    %1469 = vmatprep.subr.bf16.mxu0 0
    %1470 = vmatpush2.bf16.msra.mxu0 0
    %1471 = vmatprep.subr.bf16.mxu0 0
    %1472 = vmatpush2.bf16.msra.mxu0 0
    %1473 = vmatprep.subr.bf16.mxu0 0
    %1474 = vmatpush2.bf16.msra.mxu0 0
    %1475 = vmatprep.mubr.bf16.mxu0 0
    %1476 = vmatmul.mubr.bf16.gmra.mxu0 %v824
    %v1477 = vpop.f32.mrf.mxu0
    %v1478 = vadd.f32 %v1437, %v1477
    %v1479 = vpop.f32.mrf.mxu0
    %v1480 = vadd.f32 %v1439, %v1479
    %v1481 = vpop.f32.mrf.mxu0
    %v1482 = vpop.f32.mrf.mxu0
    %1483 = vdwg.mxu0
    %1484 = vmatprep.subr.bf16.mxu0 %v1241
    %1485 = vmatpush1.bf16.msra.mxu0 %v1240
    %1486 = vmatprep.subr.bf16.mxu0 %v1237
    %1487 = vmatpush1.bf16.msra.mxu0 %v1236
    %1488 = vmatprep.subr.bf16.mxu0 %v1233
    %1489 = vmatpush1.bf16.msra.mxu0 %v1232
    %1490 = vmatprep.subr.bf16.mxu0 %v1229
    %1491 = vmatpush1.bf16.msra.mxu0 %v1228
    %1492 = vmatprep.subr.bf16.mxu0 %v1225
    %1493 = vmatpush1.bf16.msra.mxu0 %v1224
    %1494 = vmatprep.subr.bf16.mxu0 %v1221
    %1495 = vmatpush1.bf16.msra.mxu0 %v1220
    %1496 = vmatprep.subr.bf16.mxu0 %v1217
    %1497 = vmatpush1.bf16.msra.mxu0 %v1216
    %1498 = vmatprep.subr.bf16.mxu0 %v1213
    %1499 = vmatpush1.bf16.msra.mxu0 %v1212
    %1500 = vmatprep.subr.bf16.mxu0 %v1273
    %1501 = vmatpush2.bf16.msra.mxu0 %v1272
    %1502 = vmatprep.subr.bf16.mxu0 %v1269
    %1503 = vmatpush2.bf16.msra.mxu0 %v1268
    %1504 = vmatprep.subr.bf16.mxu0 %v1265
    %1505 = vmatpush2.bf16.msra.mxu0 %v1264
    %1506 = vmatprep.subr.bf16.mxu0 %v1261
    %1507 = vmatpush2.bf16.msra.mxu0 %v1260
    %1508 = vmatprep.subr.bf16.mxu0 %v1257
    %1509 = vmatpush2.bf16.msra.mxu0 %v1256
    %1510 = vmatprep.subr.bf16.mxu0 %v1253
    %1511 = vmatpush2.bf16.msra.mxu0 %v1252
    %1512 = vmatprep.subr.bf16.mxu0 %v1249
    %1513 = vmatpush2.bf16.msra.mxu0 %v1248
    %1514 = vmatprep.subr.bf16.mxu0 %v1245
    %1515 = vmatpush2.bf16.msra.mxu0 %v1244
    %1516 = vmatprep.mubr.bf16.mxu0 %v823
    %1517 = vmatmul.mubr.bf16.gmra.mxu0 %v822
    %v1518 = vpop.f32.mrf.mxu0
    %v1519 = vadd.f32 0.0, %v1518
    %v1520 = vpop.f32.mrf.mxu0
    %v1521 = vadd.f32 0.0, %v1520
    %v1522 = vpop.f32.mrf.mxu0
    %v1523 = vpop.f32.mrf.mxu0
    %1524 = vdwg.mxu0
    %1525 = vmatprep.subr.bf16.mxu0 %v1305
    %1526 = vmatpush1.bf16.msra.mxu0 %v1304
    %1527 = vmatprep.subr.bf16.mxu0 %v1301
    %1528 = vmatpush1.bf16.msra.mxu0 %v1300
    %1529 = vmatprep.subr.bf16.mxu0 %v1297
    %1530 = vmatpush1.bf16.msra.mxu0 %v1296
    %1531 = vmatprep.subr.bf16.mxu0 %v1293
    %1532 = vmatpush1.bf16.msra.mxu0 %v1292
    %1533 = vmatprep.subr.bf16.mxu0 %v1289
    %1534 = vmatpush1.bf16.msra.mxu0 %v1288
    %1535 = vmatprep.subr.bf16.mxu0 %v1285
    %1536 = vmatpush1.bf16.msra.mxu0 %v1284
    %1537 = vmatprep.subr.bf16.mxu0 %v1281
    %1538 = vmatpush1.bf16.msra.mxu0 %v1280
    %1539 = vmatprep.subr.bf16.mxu0 %v1277
    %1540 = vmatpush1.bf16.msra.mxu0 %v1276
    %1541 = vmatprep.subr.bf16.mxu0 0
    %1542 = vmatpush2.bf16.msra.mxu0 0
    %1543 = vmatprep.subr.bf16.mxu0 0
    %1544 = vmatpush2.bf16.msra.mxu0 0
    %1545 = vmatprep.subr.bf16.mxu0 0
    %1546 = vmatpush2.bf16.msra.mxu0 0
    %1547 = vmatprep.subr.bf16.mxu0 0
    %1548 = vmatpush2.bf16.msra.mxu0 0
    %1549 = vmatprep.subr.bf16.mxu0 0
    %1550 = vmatpush2.bf16.msra.mxu0 0
    %1551 = vmatprep.subr.bf16.mxu0 0
    %1552 = vmatpush2.bf16.msra.mxu0 0
    %1553 = vmatprep.subr.bf16.mxu0 0
    %1554 = vmatpush2.bf16.msra.mxu0 0
    %1555 = vmatprep.subr.bf16.mxu0 0
    %1556 = vmatpush2.bf16.msra.mxu0 0
    %1557 = vmatprep.mubr.bf16.mxu0 0
    %1558 = vmatmul.mubr.bf16.gmra.mxu0 %v824
    %v1559 = vpop.f32.mrf.mxu0
    %v1560 = vadd.f32 %v1519, %v1559
    %v1561 = vpop.f32.mrf.mxu0
    %v1562 = vadd.f32 %v1521, %v1561
    %v1563 = vpop.f32.mrf.mxu0
    %v1564 = vpop.f32.mrf.mxu0
    %1565 = vdwg.mxu0
    %v1566 = vxor.u32 %v1478, 2147483648
    %v1567 = vxor.u32 %v1480, 2147483648
    %v1568 = vxor.u32 %v1560, 2147483648
    %v1569 = vmul.f32 %v1566, 1.442695
    %v1570 = vpow.pop %v1569
    %v1571 = vmul.f32 %v1567, 1.442695
    %v1572 = vpow.pop %v1571
    %v1573 = vmul.f32 %v1568, 1.442695
    %v1574 = vpow.pop %v1573
    %v1575 = vadd.f32 %v1570, 1.0
    %v1576 = vadd.f32 %v1572, 1.0
    %v1577 = vadd.f32 %v1574, 1.0
    %v1578 = vrcp.pop %v1575
    %v1579 = vmul.f32 1.0, %v1578
    %v1580 = vrcp.pop %v1576
    %v1581 = vmul.f32 1.0, %v1580
    %v1582 = vrcp.pop %v1577
    %v1583 = vmul.f32 1.0, %v1582
    %v1584 = vtanh.pop %v1562
    %s1585 = scalar_lea.vmem %s2, 8
    %v1586 = vld [vmem:[%s1585] sm:$0xff]
    %v1587 = vmul.f32 %v1581, %v1586
    %v1588 = vmul.f32 %v1579, %v1584
    %v1589 = vadd.f32 %v1587, %v1588
    %v1590 = vtanh.pop %v1589
    %v1591 = vmul.f32 %v1583, %v1590
    %s1592 = scalar_lea.vmem %s4, 8
    %1593 = vst [vmem:[%s1592] sm:$0xff] %v1591
    %s1594 = scalar_lea.vmem %s5, 8
    %1595 = vst [vmem:[%s1594] sm:$0xff] %v1589
    %1596 = vst [vmem:[#allocation2] sm:$0xff] %v1591
    %s1597 = scalar_lea.vmem %s1, 16
    %v1598 = vld [vmem:[%s1597] sm:$0xff]
    %1599 = vst [vmem:[#allocation2 + $0x8] sm:$0xff] %v1598
    %v1600 = vld [vmem:[#allocation2] sm:$0xff]
    %v1601 = vld [vmem:[#allocation2 + $0x8] sm:$0xff]
    %v1602 = vld [vmem:[#allocation2 + $0x10] sm:$0xff]
    %v1603 = vpack.c.bf16 %v1600, %v1600
    %v1604 = vpack.c.bf16 %v1601, %v1601
    %v1605 = vpack.c.bf16 %v1602, %v1602
    %s1606 = scalar_lea.vmem [#allocation3], 1536
    %v1607 = vld [vmem:[%s1606] sm:$0xff]
    %v1608 = vld [vmem:[%s1606 + $0x8] sm:$0xff]
    %v1609 = vld [vmem:[%s1606 + $0x10] sm:$0xff]
    %v1610 = vld [vmem:[%s1606 + $0x18] sm:$0xff]
    %v1611 = vld [vmem:[%s1606 + $0x20] sm:$0xff]
    %v1612 = vld [vmem:[%s1606 + $0x28] sm:$0xff]
    %v1613 = vld [vmem:[%s1606 + $0x30] sm:$0xff]
    %v1614 = vld [vmem:[%s1606 + $0x38] sm:$0xff]
    %v1615 = vld [vmem:[%s1606 + $0x40] sm:$0xff]
    %v1616 = vld [vmem:[%s1606 + $0x48] sm:$0xff]
    %v1617 = vld [vmem:[%s1606 + $0x50] sm:$0xff]
    %v1618 = vld [vmem:[%s1606 + $0x58] sm:$0xff]
    %v1619 = vld [vmem:[%s1606 + $0x60] sm:$0xff]
    %v1620 = vld [vmem:[%s1606 + $0x68] sm:$0xff]
    %v1621 = vld [vmem:[%s1606 + $0x70] sm:$0xff]
    %v1622 = vld [vmem:[%s1606 + $0x78] sm:$0xff]
    %v1623 = vld [vmem:[%s1606 + $0x80] sm:$0xff]
    %v1624 = vld [vmem:[%s1606 + $0x88] sm:$0xff]
    %v1625 = vld [vmem:[%s1606 + $0x90] sm:$0xff]
    %v1626 = vld [vmem:[%s1606 + $0x98] sm:$0xff]
    %v1627 = vld [vmem:[%s1606 + $0xa0] sm:$0xff]
    %v1628 = vld [vmem:[%s1606 + $0xa8] sm:$0xff]
    %v1629 = vld [vmem:[%s1606 + $0xb0] sm:$0xff]
    %v1630 = vld [vmem:[%s1606 + $0xb8] sm:$0xff]
    %v1631 = vld [vmem:[%s1606 + $0xc0] sm:$0xff]
    %v1632 = vld [vmem:[%s1606 + $0xc8] sm:$0xff]
    %v1633 = vld [vmem:[%s1606 + $0xd0] sm:$0xff]
    %v1634 = vld [vmem:[%s1606 + $0xd8] sm:$0xff]
    %v1635 = vld [vmem:[%s1606 + $0xe0] sm:$0xff]
    %v1636 = vld [vmem:[%s1606 + $0xe8] sm:$0xff]
    %v1637 = vld [vmem:[%s1606 + $0xf0] sm:$0xff]
    %v1638 = vld [vmem:[%s1606 + $0xf8] sm:$0xff]
    %v1639 = vld [vmem:[%s1606 + $0x100] sm:$0xff]
    %v1640 = vld [vmem:[%s1606 + $0x108] sm:$0xff]
    %v1641 = vld [vmem:[%s1606 + $0x110] sm:$0xff]
    %v1642 = vld [vmem:[%s1606 + $0x118] sm:$0xff]
    %v1643 = vld [vmem:[%s1606 + $0x120] sm:$0xff]
    %v1644 = vld [vmem:[%s1606 + $0x128] sm:$0xff]
    %v1645 = vld [vmem:[%s1606 + $0x130] sm:$0xff]
    %v1646 = vld [vmem:[%s1606 + $0x138] sm:$0xff]
    %v1647 = vld [vmem:[%s1606 + $0x140] sm:$0xff]
    %v1648 = vld [vmem:[%s1606 + $0x148] sm:$0xff]
    %v1649 = vld [vmem:[%s1606 + $0x150] sm:$0xff]
    %v1650 = vld [vmem:[%s1606 + $0x158] sm:$0xff]
    %v1651 = vld [vmem:[%s1606 + $0x160] sm:$0xff]
    %v1652 = vld [vmem:[%s1606 + $0x168] sm:$0xff]
    %v1653 = vld [vmem:[%s1606 + $0x170] sm:$0xff]
    %v1654 = vld [vmem:[%s1606 + $0x178] sm:$0xff]
    %v1655 = vld [vmem:[%s1606 + $0x180] sm:$0xff]
    %v1656 = vld [vmem:[%s1606 + $0x188] sm:$0xff]
    %v1657 = vld [vmem:[%s1606 + $0x190] sm:$0xff]
    %v1658 = vld [vmem:[%s1606 + $0x198] sm:$0xff]
    %v1659 = vld [vmem:[%s1606 + $0x1a0] sm:$0xff]
    %v1660 = vld [vmem:[%s1606 + $0x1a8] sm:$0xff]
    %v1661 = vld [vmem:[%s1606 + $0x1b0] sm:$0xff]
    %v1662 = vld [vmem:[%s1606 + $0x1b8] sm:$0xff]
    %v1663 = vld [vmem:[%s1606 + $0x1c0] sm:$0xff]
    %v1664 = vld [vmem:[%s1606 + $0x1c8] sm:$0xff]
    %v1665 = vld [vmem:[%s1606 + $0x1d0] sm:$0xff]
    %v1666 = vld [vmem:[%s1606 + $0x1d8] sm:$0xff]
    %v1667 = vld [vmem:[%s1606 + $0x1e0] sm:$0xff]
    %v1668 = vld [vmem:[%s1606 + $0x1e8] sm:$0xff]
    %v1669 = vld [vmem:[%s1606 + $0x1f0] sm:$0xff]
    %v1670 = vld [vmem:[%s1606 + $0x1f8] sm:$0xff]
    %v1671 = vld [vmem:[%s1606 + $0x200] sm:$0xff]
    %v1672 = vld [vmem:[%s1606 + $0x208] sm:$0xff]
    %v1673 = vld [vmem:[%s1606 + $0x210] sm:$0xff]
    %v1674 = vld [vmem:[%s1606 + $0x218] sm:$0xff]
    %v1675 = vld [vmem:[%s1606 + $0x220] sm:$0xff]
    %v1676 = vld [vmem:[%s1606 + $0x228] sm:$0xff]
    %v1677 = vld [vmem:[%s1606 + $0x230] sm:$0xff]
    %v1678 = vld [vmem:[%s1606 + $0x238] sm:$0xff]
    %v1679 = vld [vmem:[%s1606 + $0x240] sm:$0xff]
    %v1680 = vld [vmem:[%s1606 + $0x248] sm:$0xff]
    %v1681 = vld [vmem:[%s1606 + $0x250] sm:$0xff]
    %v1682 = vld [vmem:[%s1606 + $0x258] sm:$0xff]
    %v1683 = vld [vmem:[%s1606 + $0x260] sm:$0xff]
    %v1684 = vld [vmem:[%s1606 + $0x268] sm:$0xff]
    %v1685 = vld [vmem:[%s1606 + $0x270] sm:$0xff]
    %v1686 = vld [vmem:[%s1606 + $0x278] sm:$0xff]
    %v1687 = vld [vmem:[%s1606 + $0x280] sm:$0xff]
    %v1688 = vld [vmem:[%s1606 + $0x288] sm:$0xff]
    %v1689 = vld [vmem:[%s1606 + $0x290] sm:$0xff]
    %v1690 = vld [vmem:[%s1606 + $0x298] sm:$0xff]
    %v1691 = vld [vmem:[%s1606 + $0x2a0] sm:$0xff]
    %v1692 = vld [vmem:[%s1606 + $0x2a8] sm:$0xff]
    %v1693 = vld [vmem:[%s1606 + $0x2b0] sm:$0xff]
    %v1694 = vld [vmem:[%s1606 + $0x2b8] sm:$0xff]
    %v1695 = vld [vmem:[%s1606 + $0x2c0] sm:$0xff]
    %v1696 = vld [vmem:[%s1606 + $0x2c8] sm:$0xff]
    %v1697 = vld [vmem:[%s1606 + $0x2d0] sm:$0xff]
    %v1698 = vld [vmem:[%s1606 + $0x2d8] sm:$0xff]
    %v1699 = vld [vmem:[%s1606 + $0x2e0] sm:$0xff]
    %v1700 = vld [vmem:[%s1606 + $0x2e8] sm:$0xff]
    %v1701 = vld [vmem:[%s1606 + $0x2f0] sm:$0xff]
    %v1702 = vld [vmem:[%s1606 + $0x2f8] sm:$0xff]
    %v1799 = vunpack.c.l.b16 %v1607
    %v1800 = vunpack.c.h.b16 %v1607
    %v1801 = vunpack.c.l.b16 %v1608
    %v1802 = vunpack.c.h.b16 %v1608
    %v1803 = vunpack.c.l.b16 %v1609
    %v1804 = vunpack.c.h.b16 %v1609
    %v1805 = vunpack.c.l.b16 %v1610
    %v1806 = vunpack.c.h.b16 %v1610
    %v1807 = vunpack.c.l.b16 %v1611
    %v1808 = vunpack.c.h.b16 %v1611
    %v1809 = vunpack.c.l.b16 %v1612
    %v1810 = vunpack.c.h.b16 %v1612
    %v1811 = vunpack.c.l.b16 %v1613
    %v1812 = vunpack.c.h.b16 %v1613
    %v1813 = vunpack.c.l.b16 %v1614
    %v1814 = vunpack.c.h.b16 %v1614
    %v1815 = vunpack.c.l.b16 %v1615
    %v1816 = vunpack.c.h.b16 %v1615
    %v1817 = vunpack.c.l.b16 %v1616
    %v1818 = vunpack.c.h.b16 %v1616
    %v1819 = vunpack.c.l.b16 %v1617
    %v1820 = vunpack.c.h.b16 %v1617
    %v1821 = vunpack.c.l.b16 %v1618
    %v1822 = vunpack.c.h.b16 %v1618
    %v1823 = vunpack.c.l.b16 %v1619
    %v1824 = vunpack.c.h.b16 %v1619
    %v1825 = vunpack.c.l.b16 %v1620
    %v1826 = vunpack.c.h.b16 %v1620
    %v1827 = vunpack.c.l.b16 %v1621
    %v1828 = vunpack.c.h.b16 %v1621
    %v1829 = vunpack.c.l.b16 %v1622
    %v1830 = vunpack.c.h.b16 %v1622
    %v1831 = vunpack.c.l.b16 %v1623
    %v1832 = vunpack.c.h.b16 %v1623
    %v1833 = vunpack.c.l.b16 %v1624
    %v1834 = vunpack.c.h.b16 %v1624
    %v1835 = vunpack.c.l.b16 %v1625
    %v1836 = vunpack.c.h.b16 %v1625
    %v1837 = vunpack.c.l.b16 %v1626
    %v1838 = vunpack.c.h.b16 %v1626
    %v1839 = vunpack.c.l.b16 %v1627
    %v1840 = vunpack.c.h.b16 %v1627
    %v1841 = vunpack.c.l.b16 %v1628
    %v1842 = vunpack.c.h.b16 %v1628
    %v1843 = vunpack.c.l.b16 %v1629
    %v1844 = vunpack.c.h.b16 %v1629
    %v1845 = vunpack.c.l.b16 %v1630
    %v1846 = vunpack.c.h.b16 %v1630
    %v1847 = vunpack.c.l.b16 %v1631
    %v1848 = vunpack.c.h.b16 %v1631
    %v1849 = vunpack.c.l.b16 %v1632
    %v1850 = vunpack.c.h.b16 %v1632
    %v1851 = vunpack.c.l.b16 %v1633
    %v1852 = vunpack.c.h.b16 %v1633
    %v1853 = vunpack.c.l.b16 %v1634
    %v1854 = vunpack.c.h.b16 %v1634
    %v1855 = vunpack.c.l.b16 %v1635
    %v1856 = vunpack.c.h.b16 %v1635
    %v1857 = vunpack.c.l.b16 %v1636
    %v1858 = vunpack.c.h.b16 %v1636
    %v1859 = vunpack.c.l.b16 %v1637
    %v1860 = vunpack.c.h.b16 %v1637
    %v1861 = vunpack.c.l.b16 %v1638
    %v1862 = vunpack.c.h.b16 %v1638
    %v1863 = vunpack.c.l.b16 %v1639
    %v1864 = vunpack.c.h.b16 %v1639
    %v1865 = vunpack.c.l.b16 %v1640
    %v1866 = vunpack.c.h.b16 %v1640
    %v1867 = vunpack.c.l.b16 %v1641
    %v1868 = vunpack.c.h.b16 %v1641
    %v1869 = vunpack.c.l.b16 %v1642
    %v1870 = vunpack.c.h.b16 %v1642
    %v1871 = vunpack.c.l.b16 %v1643
    %v1872 = vunpack.c.h.b16 %v1643
    %v1873 = vunpack.c.l.b16 %v1644
    %v1874 = vunpack.c.h.b16 %v1644
    %v1875 = vunpack.c.l.b16 %v1645
    %v1876 = vunpack.c.h.b16 %v1645
    %v1877 = vunpack.c.l.b16 %v1646
    %v1878 = vunpack.c.h.b16 %v1646
    %v1879 = vunpack.c.l.b16 %v1647
    %v1880 = vunpack.c.h.b16 %v1647
    %v1881 = vunpack.c.l.b16 %v1648
    %v1882 = vunpack.c.h.b16 %v1648
    %v1883 = vunpack.c.l.b16 %v1649
    %v1884 = vunpack.c.h.b16 %v1649
    %v1885 = vunpack.c.l.b16 %v1650
    %v1886 = vunpack.c.h.b16 %v1650
    %v1887 = vunpack.c.l.b16 %v1651
    %v1888 = vunpack.c.h.b16 %v1651
    %v1889 = vunpack.c.l.b16 %v1652
    %v1890 = vunpack.c.h.b16 %v1652
    %v1891 = vunpack.c.l.b16 %v1653
    %v1892 = vunpack.c.h.b16 %v1653
    %v1893 = vunpack.c.l.b16 %v1654
    %v1894 = vunpack.c.h.b16 %v1654
    %v1895 = vunpack.c.l.b16 %v1655
    %v1896 = vunpack.c.h.b16 %v1655
    %v1897 = vunpack.c.l.b16 %v1656
    %v1898 = vunpack.c.h.b16 %v1656
    %v1899 = vunpack.c.l.b16 %v1657
    %v1900 = vunpack.c.h.b16 %v1657
    %v1901 = vunpack.c.l.b16 %v1658
    %v1902 = vunpack.c.h.b16 %v1658
    %v1903 = vunpack.c.l.b16 %v1659
    %v1904 = vunpack.c.h.b16 %v1659
    %v1905 = vunpack.c.l.b16 %v1660
    %v1906 = vunpack.c.h.b16 %v1660
    %v1907 = vunpack.c.l.b16 %v1661
    %v1908 = vunpack.c.h.b16 %v1661
    %v1909 = vunpack.c.l.b16 %v1662
    %v1910 = vunpack.c.h.b16 %v1662
    %v1911 = vunpack.c.l.b16 %v1663
    %v1912 = vunpack.c.h.b16 %v1663
    %v1913 = vunpack.c.l.b16 %v1664
    %v1914 = vunpack.c.h.b16 %v1664
    %v1915 = vunpack.c.l.b16 %v1665
    %v1916 = vunpack.c.h.b16 %v1665
    %v1917 = vunpack.c.l.b16 %v1666
    %v1918 = vunpack.c.h.b16 %v1666
    %v1919 = vunpack.c.l.b16 %v1667
    %v1920 = vunpack.c.h.b16 %v1667
    %v1921 = vunpack.c.l.b16 %v1668
    %v1922 = vunpack.c.h.b16 %v1668
    %v1923 = vunpack.c.l.b16 %v1669
    %v1924 = vunpack.c.h.b16 %v1669
    %v1925 = vunpack.c.l.b16 %v1670
    %v1926 = vunpack.c.h.b16 %v1670
    %v1927 = vunpack.c.l.b16 %v1671
    %v1928 = vunpack.c.h.b16 %v1671
    %v1929 = vunpack.c.l.b16 %v1672
    %v1930 = vunpack.c.h.b16 %v1672
    %v1931 = vunpack.c.l.b16 %v1673
    %v1932 = vunpack.c.h.b16 %v1673
    %v1933 = vunpack.c.l.b16 %v1674
    %v1934 = vunpack.c.h.b16 %v1674
    %v1935 = vunpack.c.l.b16 %v1675
    %v1936 = vunpack.c.h.b16 %v1675
    %v1937 = vunpack.c.l.b16 %v1676
    %v1938 = vunpack.c.h.b16 %v1676
    %v1939 = vunpack.c.l.b16 %v1677
    %v1940 = vunpack.c.h.b16 %v1677
    %v1941 = vunpack.c.l.b16 %v1678
    %v1942 = vunpack.c.h.b16 %v1678
    %v1943 = vunpack.c.l.b16 %v1679
    %v1944 = vunpack.c.h.b16 %v1679
    %v1945 = vunpack.c.l.b16 %v1680
    %v1946 = vunpack.c.h.b16 %v1680
    %v1947 = vunpack.c.l.b16 %v1681
    %v1948 = vunpack.c.h.b16 %v1681
    %v1949 = vunpack.c.l.b16 %v1682
    %v1950 = vunpack.c.h.b16 %v1682
    %v1951 = vunpack.c.l.b16 %v1683
    %v1952 = vunpack.c.h.b16 %v1683
    %v1953 = vunpack.c.l.b16 %v1684
    %v1954 = vunpack.c.h.b16 %v1684
    %v1955 = vunpack.c.l.b16 %v1685
    %v1956 = vunpack.c.h.b16 %v1685
    %v1957 = vunpack.c.l.b16 %v1686
    %v1958 = vunpack.c.h.b16 %v1686
    %v1959 = vunpack.c.l.b16 %v1687
    %v1960 = vunpack.c.h.b16 %v1687
    %v1961 = vunpack.c.l.b16 %v1688
    %v1962 = vunpack.c.h.b16 %v1688
    %v1963 = vunpack.c.l.b16 %v1689
    %v1964 = vunpack.c.h.b16 %v1689
    %v1965 = vunpack.c.l.b16 %v1690
    %v1966 = vunpack.c.h.b16 %v1690
    %v1967 = vunpack.c.l.b16 %v1691
    %v1968 = vunpack.c.h.b16 %v1691
    %v1969 = vunpack.c.l.b16 %v1692
    %v1970 = vunpack.c.h.b16 %v1692
    %v1971 = vunpack.c.l.b16 %v1693
    %v1972 = vunpack.c.h.b16 %v1693
    %v1973 = vunpack.c.l.b16 %v1694
    %v1974 = vunpack.c.h.b16 %v1694
    %v1975 = vunpack.c.l.b16 %v1695
    %v1976 = vunpack.c.h.b16 %v1695
    %v1977 = vunpack.c.l.b16 %v1696
    %v1978 = vunpack.c.h.b16 %v1696
    %v1979 = vunpack.c.l.b16 %v1697
    %v1980 = vunpack.c.h.b16 %v1697
    %v1981 = vunpack.c.l.b16 %v1698
    %v1982 = vunpack.c.h.b16 %v1698
    %v1983 = vunpack.c.l.b16 %v1699
    %v1984 = vunpack.c.h.b16 %v1699
    %v1985 = vunpack.c.l.b16 %v1700
    %v1986 = vunpack.c.h.b16 %v1700
    %v1987 = vunpack.c.l.b16 %v1701
    %v1988 = vunpack.c.h.b16 %v1701
    %v1989 = vunpack.c.l.b16 %v1702
    %v1990 = vunpack.c.h.b16 %v1702
    %v1991 = vpack.c.b16 %v1803, %v1799
    %v1992 = vpack.c.b16 %v1804, %v1800
    %v1993 = vpack.c.b16 %v1805, %v1801
    %v1994 = vpack.c.b16 %v1806, %v1802
    %v1995 = vpack.c.b16 %v1811, %v1807
    %v1996 = vpack.c.b16 %v1812, %v1808
    %v1997 = vpack.c.b16 %v1813, %v1809
    %v1998 = vpack.c.b16 %v1814, %v1810
    %v1999 = vpack.c.b16 %v1819, %v1815
    %v2000 = vpack.c.b16 %v1820, %v1816
    %v2001 = vpack.c.b16 %v1821, %v1817
    %v2002 = vpack.c.b16 %v1822, %v1818
    %v2003 = vpack.c.b16 %v1827, %v1823
    %v2004 = vpack.c.b16 %v1828, %v1824
    %v2005 = vpack.c.b16 %v1829, %v1825
    %v2006 = vpack.c.b16 %v1830, %v1826
    %v2007 = vpack.c.b16 %v1835, %v1831
    %v2008 = vpack.c.b16 %v1836, %v1832
    %v2009 = vpack.c.b16 %v1837, %v1833
    %v2010 = vpack.c.b16 %v1838, %v1834
    %v2011 = vpack.c.b16 %v1843, %v1839
    %v2012 = vpack.c.b16 %v1844, %v1840
    %v2013 = vpack.c.b16 %v1845, %v1841
    %v2014 = vpack.c.b16 %v1846, %v1842
    %v2015 = vpack.c.b16 %v1851, %v1847
    %v2016 = vpack.c.b16 %v1852, %v1848
    %v2017 = vpack.c.b16 %v1853, %v1849
    %v2018 = vpack.c.b16 %v1854, %v1850
    %v2019 = vpack.c.b16 %v1859, %v1855
    %v2020 = vpack.c.b16 %v1860, %v1856
    %v2021 = vpack.c.b16 %v1861, %v1857
    %v2022 = vpack.c.b16 %v1862, %v1858
    %v2023 = vpack.c.b16 %v1867, %v1863
    %v2024 = vpack.c.b16 %v1868, %v1864
    %v2025 = vpack.c.b16 %v1869, %v1865
    %v2026 = vpack.c.b16 %v1870, %v1866
    %v2027 = vpack.c.b16 %v1875, %v1871
    %v2028 = vpack.c.b16 %v1876, %v1872
    %v2029 = vpack.c.b16 %v1877, %v1873
    %v2030 = vpack.c.b16 %v1878, %v1874
    %v2031 = vpack.c.b16 %v1883, %v1879
    %v2032 = vpack.c.b16 %v1884, %v1880
    %v2033 = vpack.c.b16 %v1885, %v1881
    %v2034 = vpack.c.b16 %v1886, %v1882
    %v2035 = vpack.c.b16 %v1891, %v1887
    %v2036 = vpack.c.b16 %v1892, %v1888
    %v2037 = vpack.c.b16 %v1893, %v1889
    %v2038 = vpack.c.b16 %v1894, %v1890
    %v2039 = vpack.c.b16 %v1899, %v1895
    %v2040 = vpack.c.b16 %v1900, %v1896
    %v2041 = vpack.c.b16 %v1901, %v1897
    %v2042 = vpack.c.b16 %v1902, %v1898
    %v2043 = vpack.c.b16 %v1907, %v1903
    %v2044 = vpack.c.b16 %v1908, %v1904
    %v2045 = vpack.c.b16 %v1909, %v1905
    %v2046 = vpack.c.b16 %v1910, %v1906
    %v2047 = vpack.c.b16 %v1915, %v1911
    %v2048 = vpack.c.b16 %v1916, %v1912
    %v2049 = vpack.c.b16 %v1917, %v1913
    %v2050 = vpack.c.b16 %v1918, %v1914
    %v2051 = vpack.c.b16 %v1923, %v1919
    %v2052 = vpack.c.b16 %v1924, %v1920
    %v2053 = vpack.c.b16 %v1925, %v1921
    %v2054 = vpack.c.b16 %v1926, %v1922
    %v2055 = vpack.c.b16 %v1931, %v1927
    %v2056 = vpack.c.b16 %v1932, %v1928
    %v2057 = vpack.c.b16 %v1933, %v1929
    %v2058 = vpack.c.b16 %v1934, %v1930
    %v2059 = vpack.c.b16 %v1939, %v1935
    %v2060 = vpack.c.b16 %v1940, %v1936
    %v2061 = vpack.c.b16 %v1941, %v1937
    %v2062 = vpack.c.b16 %v1942, %v1938
    %v2063 = vpack.c.b16 %v1947, %v1943
    %v2064 = vpack.c.b16 %v1948, %v1944
    %v2065 = vpack.c.b16 %v1949, %v1945
    %v2066 = vpack.c.b16 %v1950, %v1946
    %v2067 = vpack.c.b16 %v1955, %v1951
    %v2068 = vpack.c.b16 %v1956, %v1952
    %v2069 = vpack.c.b16 %v1957, %v1953
    %v2070 = vpack.c.b16 %v1958, %v1954
    %v2071 = vpack.c.b16 %v1963, %v1959
    %v2072 = vpack.c.b16 %v1964, %v1960
    %v2073 = vpack.c.b16 %v1965, %v1961
    %v2074 = vpack.c.b16 %v1966, %v1962
    %v2075 = vpack.c.b16 %v1971, %v1967
    %v2076 = vpack.c.b16 %v1972, %v1968
    %v2077 = vpack.c.b16 %v1973, %v1969
    %v2078 = vpack.c.b16 %v1974, %v1970
    %v2079 = vpack.c.b16 %v1979, %v1975
    %v2080 = vpack.c.b16 %v1980, %v1976
    %v2081 = vpack.c.b16 %v1981, %v1977
    %v2082 = vpack.c.b16 %v1982, %v1978
    %v2083 = vpack.c.b16 %v1987, %v1983
    %v2084 = vpack.c.b16 %v1988, %v1984
    %v2085 = vpack.c.b16 %v1989, %v1985
    %v2086 = vpack.c.b16 %v1990, %v1986
    %2183 = vmatprep.subr.bf16.mxu0 %v2020
    %2184 = vmatpush1.bf16.msra.mxu0 %v2019
    %2185 = vmatprep.subr.bf16.mxu0 %v2016
    %2186 = vmatpush1.bf16.msra.mxu0 %v2015
    %2187 = vmatprep.subr.bf16.mxu0 %v2012
    %2188 = vmatpush1.bf16.msra.mxu0 %v2011
    %2189 = vmatprep.subr.bf16.mxu0 %v2008
    %2190 = vmatpush1.bf16.msra.mxu0 %v2007
    %2191 = vmatprep.subr.bf16.mxu0 %v2004
    %2192 = vmatpush1.bf16.msra.mxu0 %v2003
    %2193 = vmatprep.subr.bf16.mxu0 %v2000
    %2194 = vmatpush1.bf16.msra.mxu0 %v1999
    %2195 = vmatprep.subr.bf16.mxu0 %v1996
    %2196 = vmatpush1.bf16.msra.mxu0 %v1995
    %2197 = vmatprep.subr.bf16.mxu0 %v1992
    %2198 = vmatpush1.bf16.msra.mxu0 %v1991
    %2199 = vmatprep.subr.bf16.mxu0 %v2052
    %2200 = vmatpush2.bf16.msra.mxu0 %v2051
    %2201 = vmatprep.subr.bf16.mxu0 %v2048
    %2202 = vmatpush2.bf16.msra.mxu0 %v2047
    %2203 = vmatprep.subr.bf16.mxu0 %v2044
    %2204 = vmatpush2.bf16.msra.mxu0 %v2043
    %2205 = vmatprep.subr.bf16.mxu0 %v2040
    %2206 = vmatpush2.bf16.msra.mxu0 %v2039
    %2207 = vmatprep.subr.bf16.mxu0 %v2036
    %2208 = vmatpush2.bf16.msra.mxu0 %v2035
    %2209 = vmatprep.subr.bf16.mxu0 %v2032
    %2210 = vmatpush2.bf16.msra.mxu0 %v2031
    %2211 = vmatprep.subr.bf16.mxu0 %v2028
    %2212 = vmatpush2.bf16.msra.mxu0 %v2027
    %2213 = vmatprep.subr.bf16.mxu0 %v2024
    %2214 = vmatpush2.bf16.msra.mxu0 %v2023
    %2215 = vmatprep.mubr.bf16.mxu0 %v1604
    %2216 = vmatmul.mubr.bf16.gmra.mxu0 %v1603
    %v2217 = vpop.f32.mrf.mxu0
    %v2218 = vadd.f32 0.0, %v2217
    %v2219 = vpop.f32.mrf.mxu0
    %v2220 = vadd.f32 0.0, %v2219
    %v2221 = vpop.f32.mrf.mxu0
    %v2222 = vpop.f32.mrf.mxu0
    %2223 = vdwg.mxu0
    %2224 = vmatprep.subr.bf16.mxu0 %v2084
    %2225 = vmatpush1.bf16.msra.mxu0 %v2083
    %2226 = vmatprep.subr.bf16.mxu0 %v2080
    %2227 = vmatpush1.bf16.msra.mxu0 %v2079
    %2228 = vmatprep.subr.bf16.mxu0 %v2076
    %2229 = vmatpush1.bf16.msra.mxu0 %v2075
    %2230 = vmatprep.subr.bf16.mxu0 %v2072
    %2231 = vmatpush1.bf16.msra.mxu0 %v2071
    %2232 = vmatprep.subr.bf16.mxu0 %v2068
    %2233 = vmatpush1.bf16.msra.mxu0 %v2067
    %2234 = vmatprep.subr.bf16.mxu0 %v2064
    %2235 = vmatpush1.bf16.msra.mxu0 %v2063
    %2236 = vmatprep.subr.bf16.mxu0 %v2060
    %2237 = vmatpush1.bf16.msra.mxu0 %v2059
    %2238 = vmatprep.subr.bf16.mxu0 %v2056
    %2239 = vmatpush1.bf16.msra.mxu0 %v2055
    %2240 = vmatprep.subr.bf16.mxu0 0
    %2241 = vmatpush2.bf16.msra.mxu0 0
    %2242 = vmatprep.subr.bf16.mxu0 0
    %2243 = vmatpush2.bf16.msra.mxu0 0
    %2244 = vmatprep.subr.bf16.mxu0 0
    %2245 = vmatpush2.bf16.msra.mxu0 0
    %2246 = vmatprep.subr.bf16.mxu0 0
    %2247 = vmatpush2.bf16.msra.mxu0 0
    %2248 = vmatprep.subr.bf16.mxu0 0
    %2249 = vmatpush2.bf16.msra.mxu0 0
    %2250 = vmatprep.subr.bf16.mxu0 0
    %2251 = vmatpush2.bf16.msra.mxu0 0
    %2252 = vmatprep.subr.bf16.mxu0 0
    %2253 = vmatpush2.bf16.msra.mxu0 0
    %2254 = vmatprep.subr.bf16.mxu0 0
    %2255 = vmatpush2.bf16.msra.mxu0 0
    %2256 = vmatprep.mubr.bf16.mxu0 0
    %2257 = vmatmul.mubr.bf16.gmra.mxu0 %v1605
    %v2258 = vpop.f32.mrf.mxu0
    %v2259 = vadd.f32 %v2218, %v2258
    %v2260 = vpop.f32.mrf.mxu0
    %v2261 = vadd.f32 %v2220, %v2260
    %v2262 = vpop.f32.mrf.mxu0
    %v2263 = vpop.f32.mrf.mxu0
    %2264 = vdwg.mxu0
    %2265 = vmatprep.subr.bf16.mxu0 %v2022
    %2266 = vmatpush1.bf16.msra.mxu0 %v2021
    %2267 = vmatprep.subr.bf16.mxu0 %v2018
    %2268 = vmatpush1.bf16.msra.mxu0 %v2017
    %2269 = vmatprep.subr.bf16.mxu0 %v2014
    %2270 = vmatpush1.bf16.msra.mxu0 %v2013
    %2271 = vmatprep.subr.bf16.mxu0 %v2010
    %2272 = vmatpush1.bf16.msra.mxu0 %v2009
    %2273 = vmatprep.subr.bf16.mxu0 %v2006
    %2274 = vmatpush1.bf16.msra.mxu0 %v2005
    %2275 = vmatprep.subr.bf16.mxu0 %v2002
    %2276 = vmatpush1.bf16.msra.mxu0 %v2001
    %2277 = vmatprep.subr.bf16.mxu0 %v1998
    %2278 = vmatpush1.bf16.msra.mxu0 %v1997
    %2279 = vmatprep.subr.bf16.mxu0 %v1994
    %2280 = vmatpush1.bf16.msra.mxu0 %v1993
    %2281 = vmatprep.subr.bf16.mxu0 %v2054
    %2282 = vmatpush2.bf16.msra.mxu0 %v2053
    %2283 = vmatprep.subr.bf16.mxu0 %v2050
    %2284 = vmatpush2.bf16.msra.mxu0 %v2049
    %2285 = vmatprep.subr.bf16.mxu0 %v2046
    %2286 = vmatpush2.bf16.msra.mxu0 %v2045
    %2287 = vmatprep.subr.bf16.mxu0 %v2042
    %2288 = vmatpush2.bf16.msra.mxu0 %v2041
    %2289 = vmatprep.subr.bf16.mxu0 %v2038
    %2290 = vmatpush2.bf16.msra.mxu0 %v2037
    %2291 = vmatprep.subr.bf16.mxu0 %v2034
    %2292 = vmatpush2.bf16.msra.mxu0 %v2033
    %2293 = vmatprep.subr.bf16.mxu0 %v2030
    %2294 = vmatpush2.bf16.msra.mxu0 %v2029
    %2295 = vmatprep.subr.bf16.mxu0 %v2026
    %2296 = vmatpush2.bf16.msra.mxu0 %v2025
    %2297 = vmatprep.mubr.bf16.mxu0 %v1604
    %2298 = vmatmul.mubr.bf16.gmra.mxu0 %v1603
    %v2299 = vpop.f32.mrf.mxu0
    %v2300 = vadd.f32 0.0, %v2299
    %v2301 = vpop.f32.mrf.mxu0
    %v2302 = vadd.f32 0.0, %v2301
    %v2303 = vpop.f32.mrf.mxu0
    %v2304 = vpop.f32.mrf.mxu0
    %2305 = vdwg.mxu0
    %2306 = vmatprep.subr.bf16.mxu0 %v2086
    %2307 = vmatpush1.bf16.msra.mxu0 %v2085
    %2308 = vmatprep.subr.bf16.mxu0 %v2082
    %2309 = vmatpush1.bf16.msra.mxu0 %v2081
    %2310 = vmatprep.subr.bf16.mxu0 %v2078
    %2311 = vmatpush1.bf16.msra.mxu0 %v2077
    %2312 = vmatprep.subr.bf16.mxu0 %v2074
    %2313 = vmatpush1.bf16.msra.mxu0 %v2073
    %2314 = vmatprep.subr.bf16.mxu0 %v2070
    %2315 = vmatpush1.bf16.msra.mxu0 %v2069
    %2316 = vmatprep.subr.bf16.mxu0 %v2066
    %2317 = vmatpush1.bf16.msra.mxu0 %v2065
    %2318 = vmatprep.subr.bf16.mxu0 %v2062
    %2319 = vmatpush1.bf16.msra.mxu0 %v2061
    %2320 = vmatprep.subr.bf16.mxu0 %v2058
    %2321 = vmatpush1.bf16.msra.mxu0 %v2057
    %2322 = vmatprep.subr.bf16.mxu0 0
    %2323 = vmatpush2.bf16.msra.mxu0 0
    %2324 = vmatprep.subr.bf16.mxu0 0
    %2325 = vmatpush2.bf16.msra.mxu0 0
    %2326 = vmatprep.subr.bf16.mxu0 0
    %2327 = vmatpush2.bf16.msra.mxu0 0
    %2328 = vmatprep.subr.bf16.mxu0 0
    %2329 = vmatpush2.bf16.msra.mxu0 0
    %2330 = vmatprep.subr.bf16.mxu0 0
    %2331 = vmatpush2.bf16.msra.mxu0 0
    %2332 = vmatprep.subr.bf16.mxu0 0
    %2333 = vmatpush2.bf16.msra.mxu0 0
    %2334 = vmatprep.subr.bf16.mxu0 0
    %2335 = vmatpush2.bf16.msra.mxu0 0
    %2336 = vmatprep.subr.bf16.mxu0 0
    %2337 = vmatpush2.bf16.msra.mxu0 0
    %2338 = vmatprep.mubr.bf16.mxu0 0
    %2339 = vmatmul.mubr.bf16.gmra.mxu0 %v1605
    %v2340 = vpop.f32.mrf.mxu0
    %v2341 = vadd.f32 %v2300, %v2340
    %v2342 = vpop.f32.mrf.mxu0
    %v2343 = vadd.f32 %v2302, %v2342
    %v2344 = vpop.f32.mrf.mxu0
    %v2345 = vpop.f32.mrf.mxu0
    %2346 = vdwg.mxu0
    %v2347 = vxor.u32 %v2259, 2147483648
    %v2348 = vxor.u32 %v2261, 2147483648
    %v2349 = vxor.u32 %v2341, 2147483648
    %v2350 = vmul.f32 %v2347, 1.442695
    %v2351 = vpow.pop %v2350
    %v2352 = vmul.f32 %v2348, 1.442695
    %v2353 = vpow.pop %v2352
    %v2354 = vmul.f32 %v2349, 1.442695
    %v2355 = vpow.pop %v2354
    %v2356 = vadd.f32 %v2351, 1.0
    %v2357 = vadd.f32 %v2353, 1.0
    %v2358 = vadd.f32 %v2355, 1.0
    %v2359 = vrcp.pop %v2356
    %v2360 = vmul.f32 1.0, %v2359
    %v2361 = vrcp.pop %v2357
    %v2362 = vmul.f32 1.0, %v2361
    %v2363 = vrcp.pop %v2358
    %v2364 = vmul.f32 1.0, %v2363
    %v2365 = vtanh.pop %v2343
    %s2366 = scalar_lea.vmem %s2, 16
    %v2367 = vld [vmem:[%s2366] sm:$0xff]
    %v2368 = vmul.f32 %v2362, %v2367
    %v2369 = vmul.f32 %v2360, %v2365
    %v2370 = vadd.f32 %v2368, %v2369
    %v2371 = vtanh.pop %v2370
    %v2372 = vmul.f32 %v2364, %v2371
    %s2373 = scalar_lea.vmem %s4, 16
    %2374 = vst [vmem:[%s2373] sm:$0xff] %v2372
    %s2375 = scalar_lea.vmem %s5, 16
    %2376 = vst [vmem:[%s2375] sm:$0xff] %v2370
    %2377 = vst [vmem:[#allocation2] sm:$0xff] %v2372
    %s2378 = scalar_lea.vmem %s1, 24
    %v2379 = vld [vmem:[%s2378] sm:$0xff]
    %2380 = vst [vmem:[#allocation2 + $0x8] sm:$0xff] %v2379
    %v2381 = vld [vmem:[#allocation2] sm:$0xff]
    %v2382 = vld [vmem:[#allocation2 + $0x8] sm:$0xff]
    %v2383 = vld [vmem:[#allocation2 + $0x10] sm:$0xff]
    %v2384 = vpack.c.bf16 %v2381, %v2381
    %v2385 = vpack.c.bf16 %v2382, %v2382
    %v2386 = vpack.c.bf16 %v2383, %v2383
    %s2387 = scalar_lea.vmem [#allocation3], 2304
    %v2388 = vld [vmem:[%s2387] sm:$0xff]
    %v2389 = vld [vmem:[%s2387 + $0x8] sm:$0xff]
    %v2390 = vld [vmem:[%s2387 + $0x10] sm:$0xff]
    %v2391 = vld [vmem:[%s2387 + $0x18] sm:$0xff]
    %v2392 = vld [vmem:[%s2387 + $0x20] sm:$0xff]
    %v2393 = vld [vmem:[%s2387 + $0x28] sm:$0xff]
    %v2394 = vld [vmem:[%s2387 + $0x30] sm:$0xff]
    %v2395 = vld [vmem:[%s2387 + $0x38] sm:$0xff]
    %v2396 = vld [vmem:[%s2387 + $0x40] sm:$0xff]
    %v2397 = vld [vmem:[%s2387 + $0x48] sm:$0xff]
    %v2398 = vld [vmem:[%s2387 + $0x50] sm:$0xff]
    %v2399 = vld [vmem:[%s2387 + $0x58] sm:$0xff]
    %v2400 = vld [vmem:[%s2387 + $0x60] sm:$0xff]
    %v2401 = vld [vmem:[%s2387 + $0x68] sm:$0xff]
    %v2402 = vld [vmem:[%s2387 + $0x70] sm:$0xff]
    %v2403 = vld [vmem:[%s2387 + $0x78] sm:$0xff]
    %v2404 = vld [vmem:[%s2387 + $0x80] sm:$0xff]
    %v2405 = vld [vmem:[%s2387 + $0x88] sm:$0xff]
    %v2406 = vld [vmem:[%s2387 + $0x90] sm:$0xff]
    %v2407 = vld [vmem:[%s2387 + $0x98] sm:$0xff]
    %v2408 = vld [vmem:[%s2387 + $0xa0] sm:$0xff]
    %v2409 = vld [vmem:[%s2387 + $0xa8] sm:$0xff]
    %v2410 = vld [vmem:[%s2387 + $0xb0] sm:$0xff]
    %v2411 = vld [vmem:[%s2387 + $0xb8] sm:$0xff]
    %v2412 = vld [vmem:[%s2387 + $0xc0] sm:$0xff]
    %v2413 = vld [vmem:[%s2387 + $0xc8] sm:$0xff]
    %v2414 = vld [vmem:[%s2387 + $0xd0] sm:$0xff]
    %v2415 = vld [vmem:[%s2387 + $0xd8] sm:$0xff]
    %v2416 = vld [vmem:[%s2387 + $0xe0] sm:$0xff]
    %v2417 = vld [vmem:[%s2387 + $0xe8] sm:$0xff]
    %v2418 = vld [vmem:[%s2387 + $0xf0] sm:$0xff]
    %v2419 = vld [vmem:[%s2387 + $0xf8] sm:$0xff]
    %v2420 = vld [vmem:[%s2387 + $0x100] sm:$0xff]
    %v2421 = vld [vmem:[%s2387 + $0x108] sm:$0xff]
    %v2422 = vld [vmem:[%s2387 + $0x110] sm:$0xff]
    %v2423 = vld [vmem:[%s2387 + $0x118] sm:$0xff]
    %v2424 = vld [vmem:[%s2387 + $0x120] sm:$0xff]
    %v2425 = vld [vmem:[%s2387 + $0x128] sm:$0xff]
    %v2426 = vld [vmem:[%s2387 + $0x130] sm:$0xff]
    %v2427 = vld [vmem:[%s2387 + $0x138] sm:$0xff]
    %v2428 = vld [vmem:[%s2387 + $0x140] sm:$0xff]
    %v2429 = vld [vmem:[%s2387 + $0x148] sm:$0xff]
    %v2430 = vld [vmem:[%s2387 + $0x150] sm:$0xff]
    %v2431 = vld [vmem:[%s2387 + $0x158] sm:$0xff]
    %v2432 = vld [vmem:[%s2387 + $0x160] sm:$0xff]
    %v2433 = vld [vmem:[%s2387 + $0x168] sm:$0xff]
    %v2434 = vld [vmem:[%s2387 + $0x170] sm:$0xff]
    %v2435 = vld [vmem:[%s2387 + $0x178] sm:$0xff]
    %v2436 = vld [vmem:[%s2387 + $0x180] sm:$0xff]
    %v2437 = vld [vmem:[%s2387 + $0x188] sm:$0xff]
    %v2438 = vld [vmem:[%s2387 + $0x190] sm:$0xff]
    %v2439 = vld [vmem:[%s2387 + $0x198] sm:$0xff]
    %v2440 = vld [vmem:[%s2387 + $0x1a0] sm:$0xff]
    %v2441 = vld [vmem:[%s2387 + $0x1a8] sm:$0xff]
    %v2442 = vld [vmem:[%s2387 + $0x1b0] sm:$0xff]
    %v2443 = vld [vmem:[%s2387 + $0x1b8] sm:$0xff]
    %v2444 = vld [vmem:[%s2387 + $0x1c0] sm:$0xff]
    %v2445 = vld [vmem:[%s2387 + $0x1c8] sm:$0xff]
    %v2446 = vld [vmem:[%s2387 + $0x1d0] sm:$0xff]
    %v2447 = vld [vmem:[%s2387 + $0x1d8] sm:$0xff]
    %v2448 = vld [vmem:[%s2387 + $0x1e0] sm:$0xff]
    %v2449 = vld [vmem:[%s2387 + $0x1e8] sm:$0xff]
    %v2450 = vld [vmem:[%s2387 + $0x1f0] sm:$0xff]
    %v2451 = vld [vmem:[%s2387 + $0x1f8] sm:$0xff]
    %v2452 = vld [vmem:[%s2387 + $0x200] sm:$0xff]
    %v2453 = vld [vmem:[%s2387 + $0x208] sm:$0xff]
    %v2454 = vld [vmem:[%s2387 + $0x210] sm:$0xff]
    %v2455 = vld [vmem:[%s2387 + $0x218] sm:$0xff]
    %v2456 = vld [vmem:[%s2387 + $0x220] sm:$0xff]
    %v2457 = vld [vmem:[%s2387 + $0x228] sm:$0xff]
    %v2458 = vld [vmem:[%s2387 + $0x230] sm:$0xff]
    %v2459 = vld [vmem:[%s2387 + $0x238] sm:$0xff]
    %v2460 = vld [vmem:[%s2387 + $0x240] sm:$0xff]
    %v2461 = vld [vmem:[%s2387 + $0x248] sm:$0xff]
    %v2462 = vld [vmem:[%s2387 + $0x250] sm:$0xff]
    %v2463 = vld [vmem:[%s2387 + $0x258] sm:$0xff]
    %v2464 = vld [vmem:[%s2387 + $0x260] sm:$0xff]
    %v2465 = vld [vmem:[%s2387 + $0x268] sm:$0xff]
    %v2466 = vld [vmem:[%s2387 + $0x270] sm:$0xff]
    %v2467 = vld [vmem:[%s2387 + $0x278] sm:$0xff]
    %v2468 = vld [vmem:[%s2387 + $0x280] sm:$0xff]
    %v2469 = vld [vmem:[%s2387 + $0x288] sm:$0xff]
    %v2470 = vld [vmem:[%s2387 + $0x290] sm:$0xff]
    %v2471 = vld [vmem:[%s2387 + $0x298] sm:$0xff]
    %v2472 = vld [vmem:[%s2387 + $0x2a0] sm:$0xff]
    %v2473 = vld [vmem:[%s2387 + $0x2a8] sm:$0xff]
    %v2474 = vld [vmem:[%s2387 + $0x2b0] sm:$0xff]
    %v2475 = vld [vmem:[%s2387 + $0x2b8] sm:$0xff]
    %v2476 = vld [vmem:[%s2387 + $0x2c0] sm:$0xff]
    %v2477 = vld [vmem:[%s2387 + $0x2c8] sm:$0xff]
    %v2478 = vld [vmem:[%s2387 + $0x2d0] sm:$0xff]
    %v2479 = vld [vmem:[%s2387 + $0x2d8] sm:$0xff]
    %v2480 = vld [vmem:[%s2387 + $0x2e0] sm:$0xff]
    %v2481 = vld [vmem:[%s2387 + $0x2e8] sm:$0xff]
    %v2482 = vld [vmem:[%s2387 + $0x2f0] sm:$0xff]
    %v2483 = vld [vmem:[%s2387 + $0x2f8] sm:$0xff]
    %v2580 = vunpack.c.l.b16 %v2388
    %v2581 = vunpack.c.h.b16 %v2388
    %v2582 = vunpack.c.l.b16 %v2389
    %v2583 = vunpack.c.h.b16 %v2389
    %v2584 = vunpack.c.l.b16 %v2390
    %v2585 = vunpack.c.h.b16 %v2390
    %v2586 = vunpack.c.l.b16 %v2391
    %v2587 = vunpack.c.h.b16 %v2391
    %v2588 = vunpack.c.l.b16 %v2392
    %v2589 = vunpack.c.h.b16 %v2392
    %v2590 = vunpack.c.l.b16 %v2393
    %v2591 = vunpack.c.h.b16 %v2393
    %v2592 = vunpack.c.l.b16 %v2394
    %v2593 = vunpack.c.h.b16 %v2394
    %v2594 = vunpack.c.l.b16 %v2395
    %v2595 = vunpack.c.h.b16 %v2395
    %v2596 = vunpack.c.l.b16 %v2396
    %v2597 = vunpack.c.h.b16 %v2396
    %v2598 = vunpack.c.l.b16 %v2397
    %v2599 = vunpack.c.h.b16 %v2397
    %v2600 = vunpack.c.l.b16 %v2398
    %v2601 = vunpack.c.h.b16 %v2398
    %v2602 = vunpack.c.l.b16 %v2399
    %v2603 = vunpack.c.h.b16 %v2399
    %v2604 = vunpack.c.l.b16 %v2400
    %v2605 = vunpack.c.h.b16 %v2400
    %v2606 = vunpack.c.l.b16 %v2401
    %v2607 = vunpack.c.h.b16 %v2401
    %v2608 = vunpack.c.l.b16 %v2402
    %v2609 = vunpack.c.h.b16 %v2402
    %v2610 = vunpack.c.l.b16 %v2403
    %v2611 = vunpack.c.h.b16 %v2403
    %v2612 = vunpack.c.l.b16 %v2404
    %v2613 = vunpack.c.h.b16 %v2404
    %v2614 = vunpack.c.l.b16 %v2405
    %v2615 = vunpack.c.h.b16 %v2405
    %v2616 = vunpack.c.l.b16 %v2406
    %v2617 = vunpack.c.h.b16 %v2406
    %v2618 = vunpack.c.l.b16 %v2407
    %v2619 = vunpack.c.h.b16 %v2407
    %v2620 = vunpack.c.l.b16 %v2408
    %v2621 = vunpack.c.h.b16 %v2408
    %v2622 = vunpack.c.l.b16 %v2409
    %v2623 = vunpack.c.h.b16 %v2409
    %v2624 = vunpack.c.l.b16 %v2410
    %v2625 = vunpack.c.h.b16 %v2410
    %v2626 = vunpack.c.l.b16 %v2411
    %v2627 = vunpack.c.h.b16 %v2411
    %v2628 = vunpack.c.l.b16 %v2412
    %v2629 = vunpack.c.h.b16 %v2412
    %v2630 = vunpack.c.l.b16 %v2413
    %v2631 = vunpack.c.h.b16 %v2413
    %v2632 = vunpack.c.l.b16 %v2414
    %v2633 = vunpack.c.h.b16 %v2414
    %v2634 = vunpack.c.l.b16 %v2415
    %v2635 = vunpack.c.h.b16 %v2415
    %v2636 = vunpack.c.l.b16 %v2416
    %v2637 = vunpack.c.h.b16 %v2416
    %v2638 = vunpack.c.l.b16 %v2417
    %v2639 = vunpack.c.h.b16 %v2417
    %v2640 = vunpack.c.l.b16 %v2418
    %v2641 = vunpack.c.h.b16 %v2418
    %v2642 = vunpack.c.l.b16 %v2419
    %v2643 = vunpack.c.h.b16 %v2419
    %v2644 = vunpack.c.l.b16 %v2420
    %v2645 = vunpack.c.h.b16 %v2420
    %v2646 = vunpack.c.l.b16 %v2421
    %v2647 = vunpack.c.h.b16 %v2421
    %v2648 = vunpack.c.l.b16 %v2422
    %v2649 = vunpack.c.h.b16 %v2422
    %v2650 = vunpack.c.l.b16 %v2423
    %v2651 = vunpack.c.h.b16 %v2423
    %v2652 = vunpack.c.l.b16 %v2424
    %v2653 = vunpack.c.h.b16 %v2424
    %v2654 = vunpack.c.l.b16 %v2425
    %v2655 = vunpack.c.h.b16 %v2425
    %v2656 = vunpack.c.l.b16 %v2426
    %v2657 = vunpack.c.h.b16 %v2426
    %v2658 = vunpack.c.l.b16 %v2427
    %v2659 = vunpack.c.h.b16 %v2427
    %v2660 = vunpack.c.l.b16 %v2428
    %v2661 = vunpack.c.h.b16 %v2428
    %v2662 = vunpack.c.l.b16 %v2429
    %v2663 = vunpack.c.h.b16 %v2429
    %v2664 = vunpack.c.l.b16 %v2430
    %v2665 = vunpack.c.h.b16 %v2430
    %v2666 = vunpack.c.l.b16 %v2431
    %v2667 = vunpack.c.h.b16 %v2431
    %v2668 = vunpack.c.l.b16 %v2432
    %v2669 = vunpack.c.h.b16 %v2432
    %v2670 = vunpack.c.l.b16 %v2433
    %v2671 = vunpack.c.h.b16 %v2433
    %v2672 = vunpack.c.l.b16 %v2434
    %v2673 = vunpack.c.h.b16 %v2434
    %v2674 = vunpack.c.l.b16 %v2435
    %v2675 = vunpack.c.h.b16 %v2435
    %v2676 = vunpack.c.l.b16 %v2436
    %v2677 = vunpack.c.h.b16 %v2436
    %v2678 = vunpack.c.l.b16 %v2437
    %v2679 = vunpack.c.h.b16 %v2437
    %v2680 = vunpack.c.l.b16 %v2438
    %v2681 = vunpack.c.h.b16 %v2438
    %v2682 = vunpack.c.l.b16 %v2439
    %v2683 = vunpack.c.h.b16 %v2439
    %v2684 = vunpack.c.l.b16 %v2440
    %v2685 = vunpack.c.h.b16 %v2440
    %v2686 = vunpack.c.l.b16 %v2441
    %v2687 = vunpack.c.h.b16 %v2441
    %v2688 = vunpack.c.l.b16 %v2442
    %v2689 = vunpack.c.h.b16 %v2442
    %v2690 = vunpack.c.l.b16 %v2443
    %v2691 = vunpack.c.h.b16 %v2443
    %v2692 = vunpack.c.l.b16 %v2444
    %v2693 = vunpack.c.h.b16 %v2444
    %v2694 = vunpack.c.l.b16 %v2445
    %v2695 = vunpack.c.h.b16 %v2445
    %v2696 = vunpack.c.l.b16 %v2446
    %v2697 = vunpack.c.h.b16 %v2446
    %v2698 = vunpack.c.l.b16 %v2447
    %v2699 = vunpack.c.h.b16 %v2447
    %v2700 = vunpack.c.l.b16 %v2448
    %v2701 = vunpack.c.h.b16 %v2448
    %v2702 = vunpack.c.l.b16 %v2449
    %v2703 = vunpack.c.h.b16 %v2449
    %v2704 = vunpack.c.l.b16 %v2450
    %v2705 = vunpack.c.h.b16 %v2450
    %v2706 = vunpack.c.l.b16 %v2451
    %v2707 = vunpack.c.h.b16 %v2451
    %v2708 = vunpack.c.l.b16 %v2452
    %v2709 = vunpack.c.h.b16 %v2452
    %v2710 = vunpack.c.l.b16 %v2453
    %v2711 = vunpack.c.h.b16 %v2453
    %v2712 = vunpack.c.l.b16 %v2454
    %v2713 = vunpack.c.h.b16 %v2454
    %v2714 = vunpack.c.l.b16 %v2455
    %v2715 = vunpack.c.h.b16 %v2455
    %v2716 = vunpack.c.l.b16 %v2456
    %v2717 = vunpack.c.h.b16 %v2456
    %v2718 = vunpack.c.l.b16 %v2457
    %v2719 = vunpack.c.h.b16 %v2457
    %v2720 = vunpack.c.l.b16 %v2458
    %v2721 = vunpack.c.h.b16 %v2458
    %v2722 = vunpack.c.l.b16 %v2459
    %v2723 = vunpack.c.h.b16 %v2459
    %v2724 = vunpack.c.l.b16 %v2460
    %v2725 = vunpack.c.h.b16 %v2460
    %v2726 = vunpack.c.l.b16 %v2461
    %v2727 = vunpack.c.h.b16 %v2461
    %v2728 = vunpack.c.l.b16 %v2462
    %v2729 = vunpack.c.h.b16 %v2462
    %v2730 = vunpack.c.l.b16 %v2463
    %v2731 = vunpack.c.h.b16 %v2463
    %v2732 = vunpack.c.l.b16 %v2464
    %v2733 = vunpack.c.h.b16 %v2464
    %v2734 = vunpack.c.l.b16 %v2465
    %v2735 = vunpack.c.h.b16 %v2465
    %v2736 = vunpack.c.l.b16 %v2466
    %v2737 = vunpack.c.h.b16 %v2466
    %v2738 = vunpack.c.l.b16 %v2467
    %v2739 = vunpack.c.h.b16 %v2467
    %v2740 = vunpack.c.l.b16 %v2468
    %v2741 = vunpack.c.h.b16 %v2468
    %v2742 = vunpack.c.l.b16 %v2469
    %v2743 = vunpack.c.h.b16 %v2469
    %v2744 = vunpack.c.l.b16 %v2470
    %v2745 = vunpack.c.h.b16 %v2470
    %v2746 = vunpack.c.l.b16 %v2471
    %v2747 = vunpack.c.h.b16 %v2471
    %v2748 = vunpack.c.l.b16 %v2472
    %v2749 = vunpack.c.h.b16 %v2472
    %v2750 = vunpack.c.l.b16 %v2473
    %v2751 = vunpack.c.h.b16 %v2473
    %v2752 = vunpack.c.l.b16 %v2474
    %v2753 = vunpack.c.h.b16 %v2474
    %v2754 = vunpack.c.l.b16 %v2475
    %v2755 = vunpack.c.h.b16 %v2475
    %v2756 = vunpack.c.l.b16 %v2476
    %v2757 = vunpack.c.h.b16 %v2476
    %v2758 = vunpack.c.l.b16 %v2477
    %v2759 = vunpack.c.h.b16 %v2477
    %v2760 = vunpack.c.l.b16 %v2478
    %v2761 = vunpack.c.h.b16 %v2478
    %v2762 = vunpack.c.l.b16 %v2479
    %v2763 = vunpack.c.h.b16 %v2479
    %v2764 = vunpack.c.l.b16 %v2480
    %v2765 = vunpack.c.h.b16 %v2480
    %v2766 = vunpack.c.l.b16 %v2481
    %v2767 = vunpack.c.h.b16 %v2481
    %v2768 = vunpack.c.l.b16 %v2482
    %v2769 = vunpack.c.h.b16 %v2482
    %v2770 = vunpack.c.l.b16 %v2483
    %v2771 = vunpack.c.h.b16 %v2483
    %v2772 = vpack.c.b16 %v2584, %v2580
    %v2773 = vpack.c.b16 %v2585, %v2581
    %v2774 = vpack.c.b16 %v2586, %v2582
    %v2775 = vpack.c.b16 %v2587, %v2583
    %v2776 = vpack.c.b16 %v2592, %v2588
    %v2777 = vpack.c.b16 %v2593, %v2589
    %v2778 = vpack.c.b16 %v2594, %v2590
    %v2779 = vpack.c.b16 %v2595, %v2591
    %v2780 = vpack.c.b16 %v2600, %v2596
    %v2781 = vpack.c.b16 %v2601, %v2597
    %v2782 = vpack.c.b16 %v2602, %v2598
    %v2783 = vpack.c.b16 %v2603, %v2599
    %v2784 = vpack.c.b16 %v2608, %v2604
    %v2785 = vpack.c.b16 %v2609, %v2605
    %v2786 = vpack.c.b16 %v2610, %v2606
    %v2787 = vpack.c.b16 %v2611, %v2607
    %v2788 = vpack.c.b16 %v2616, %v2612
    %v2789 = vpack.c.b16 %v2617, %v2613
    %v2790 = vpack.c.b16 %v2618, %v2614
    %v2791 = vpack.c.b16 %v2619, %v2615
    %v2792 = vpack.c.b16 %v2624, %v2620
    %v2793 = vpack.c.b16 %v2625, %v2621
    %v2794 = vpack.c.b16 %v2626, %v2622
    %v2795 = vpack.c.b16 %v2627, %v2623
    %v2796 = vpack.c.b16 %v2632, %v2628
    %v2797 = vpack.c.b16 %v2633, %v2629
    %v2798 = vpack.c.b16 %v2634, %v2630
    %v2799 = vpack.c.b16 %v2635, %v2631
    %v2800 = vpack.c.b16 %v2640, %v2636
    %v2801 = vpack.c.b16 %v2641, %v2637
    %v2802 = vpack.c.b16 %v2642, %v2638
    %v2803 = vpack.c.b16 %v2643, %v2639
    %v2804 = vpack.c.b16 %v2648, %v2644
    %v2805 = vpack.c.b16 %v2649, %v2645
    %v2806 = vpack.c.b16 %v2650, %v2646
    %v2807 = vpack.c.b16 %v2651, %v2647
    %v2808 = vpack.c.b16 %v2656, %v2652
    %v2809 = vpack.c.b16 %v2657, %v2653
    %v2810 = vpack.c.b16 %v2658, %v2654
    %v2811 = vpack.c.b16 %v2659, %v2655
    %v2812 = vpack.c.b16 %v2664, %v2660
    %v2813 = vpack.c.b16 %v2665, %v2661
    %v2814 = vpack.c.b16 %v2666, %v2662
    %v2815 = vpack.c.b16 %v2667, %v2663
    %v2816 = vpack.c.b16 %v2672, %v2668
    %v2817 = vpack.c.b16 %v2673, %v2669
    %v2818 = vpack.c.b16 %v2674, %v2670
    %v2819 = vpack.c.b16 %v2675, %v2671
    %v2820 = vpack.c.b16 %v2680, %v2676
    %v2821 = vpack.c.b16 %v2681, %v2677
    %v2822 = vpack.c.b16 %v2682, %v2678
    %v2823 = vpack.c.b16 %v2683, %v2679
    %v2824 = vpack.c.b16 %v2688, %v2684
    %v2825 = vpack.c.b16 %v2689, %v2685
    %v2826 = vpack.c.b16 %v2690, %v2686
    %v2827 = vpack.c.b16 %v2691, %v2687
    %v2828 = vpack.c.b16 %v2696, %v2692
    %v2829 = vpack.c.b16 %v2697, %v2693
    %v2830 = vpack.c.b16 %v2698, %v2694
    %v2831 = vpack.c.b16 %v2699, %v2695
    %v2832 = vpack.c.b16 %v2704, %v2700
    %v2833 = vpack.c.b16 %v2705, %v2701
    %v2834 = vpack.c.b16 %v2706, %v2702
    %v2835 = vpack.c.b16 %v2707, %v2703
    %v2836 = vpack.c.b16 %v2712, %v2708
    %v2837 = vpack.c.b16 %v2713, %v2709
    %v2838 = vpack.c.b16 %v2714, %v2710
    %v2839 = vpack.c.b16 %v2715, %v2711
    %v2840 = vpack.c.b16 %v2720, %v2716
    %v2841 = vpack.c.b16 %v2721, %v2717
    %v2842 = vpack.c.b16 %v2722, %v2718
    %v2843 = vpack.c.b16 %v2723, %v2719
    %v2844 = vpack.c.b16 %v2728, %v2724
    %v2845 = vpack.c.b16 %v2729, %v2725
    %v2846 = vpack.c.b16 %v2730, %v2726
    %v2847 = vpack.c.b16 %v2731, %v2727
    %v2848 = vpack.c.b16 %v2736, %v2732
    %v2849 = vpack.c.b16 %v2737, %v2733
    %v2850 = vpack.c.b16 %v2738, %v2734
    %v2851 = vpack.c.b16 %v2739, %v2735
    %v2852 = vpack.c.b16 %v2744, %v2740
    %v2853 = vpack.c.b16 %v2745, %v2741
    %v2854 = vpack.c.b16 %v2746, %v2742
    %v2855 = vpack.c.b16 %v2747, %v2743
    %v2856 = vpack.c.b16 %v2752, %v2748
    %v2857 = vpack.c.b16 %v2753, %v2749
    %v2858 = vpack.c.b16 %v2754, %v2750
    %v2859 = vpack.c.b16 %v2755, %v2751
    %v2860 = vpack.c.b16 %v2760, %v2756
    %v2861 = vpack.c.b16 %v2761, %v2757
    %v2862 = vpack.c.b16 %v2762, %v2758
    %v2863 = vpack.c.b16 %v2763, %v2759
    %v2864 = vpack.c.b16 %v2768, %v2764
    %v2865 = vpack.c.b16 %v2769, %v2765
    %v2866 = vpack.c.b16 %v2770, %v2766
    %v2867 = vpack.c.b16 %v2771, %v2767
    %2964 = vmatprep.subr.bf16.mxu0 %v2801
    %2965 = vmatpush1.bf16.msra.mxu0 %v2800
    %2966 = vmatprep.subr.bf16.mxu0 %v2797
    %2967 = vmatpush1.bf16.msra.mxu0 %v2796
    %2968 = vmatprep.subr.bf16.mxu0 %v2793
    %2969 = vmatpush1.bf16.msra.mxu0 %v2792
    %2970 = vmatprep.subr.bf16.mxu0 %v2789
    %2971 = vmatpush1.bf16.msra.mxu0 %v2788
    %2972 = vmatprep.subr.bf16.mxu0 %v2785
    %2973 = vmatpush1.bf16.msra.mxu0 %v2784
    %2974 = vmatprep.subr.bf16.mxu0 %v2781
    %2975 = vmatpush1.bf16.msra.mxu0 %v2780
    %2976 = vmatprep.subr.bf16.mxu0 %v2777
    %2977 = vmatpush1.bf16.msra.mxu0 %v2776
    %2978 = vmatprep.subr.bf16.mxu0 %v2773
    %2979 = vmatpush1.bf16.msra.mxu0 %v2772
    %2980 = vmatprep.subr.bf16.mxu0 %v2833
    %2981 = vmatpush2.bf16.msra.mxu0 %v2832
    %2982 = vmatprep.subr.bf16.mxu0 %v2829
    %2983 = vmatpush2.bf16.msra.mxu0 %v2828
    %2984 = vmatprep.subr.bf16.mxu0 %v2825
    %2985 = vmatpush2.bf16.msra.mxu0 %v2824
    %2986 = vmatprep.subr.bf16.mxu0 %v2821
    %2987 = vmatpush2.bf16.msra.mxu0 %v2820
    %2988 = vmatprep.subr.bf16.mxu0 %v2817
    %2989 = vmatpush2.bf16.msra.mxu0 %v2816
    %2990 = vmatprep.subr.bf16.mxu0 %v2813
    %2991 = vmatpush2.bf16.msra.mxu0 %v2812
    %2992 = vmatprep.subr.bf16.mxu0 %v2809
    %2993 = vmatpush2.bf16.msra.mxu0 %v2808
    %2994 = vmatprep.subr.bf16.mxu0 %v2805
    %2995 = vmatpush2.bf16.msra.mxu0 %v2804
    %2996 = vmatprep.mubr.bf16.mxu0 %v2385
    %2997 = vmatmul.mubr.bf16.gmra.mxu0 %v2384
    %v2998 = vpop.f32.mrf.mxu0
    %v2999 = vadd.f32 0.0, %v2998
    %v3000 = vpop.f32.mrf.mxu0
    %v3001 = vadd.f32 0.0, %v3000
    %v3002 = vpop.f32.mrf.mxu0
    %v3003 = vpop.f32.mrf.mxu0
    %3004 = vdwg.mxu0
    %3005 = vmatprep.subr.bf16.mxu0 %v2865
    %3006 = vmatpush1.bf16.msra.mxu0 %v2864
    %3007 = vmatprep.subr.bf16.mxu0 %v2861
    %3008 = vmatpush1.bf16.msra.mxu0 %v2860
    %3009 = vmatprep.subr.bf16.mxu0 %v2857
    %3010 = vmatpush1.bf16.msra.mxu0 %v2856
    %3011 = vmatprep.subr.bf16.mxu0 %v2853
    %3012 = vmatpush1.bf16.msra.mxu0 %v2852
    %3013 = vmatprep.subr.bf16.mxu0 %v2849
    %3014 = vmatpush1.bf16.msra.mxu0 %v2848
    %3015 = vmatprep.subr.bf16.mxu0 %v2845
    %3016 = vmatpush1.bf16.msra.mxu0 %v2844
    %3017 = vmatprep.subr.bf16.mxu0 %v2841
    %3018 = vmatpush1.bf16.msra.mxu0 %v2840
    %3019 = vmatprep.subr.bf16.mxu0 %v2837
    %3020 = vmatpush1.bf16.msra.mxu0 %v2836
    %3021 = vmatprep.subr.bf16.mxu0 0
    %3022 = vmatpush2.bf16.msra.mxu0 0
    %3023 = vmatprep.subr.bf16.mxu0 0
    %3024 = vmatpush2.bf16.msra.mxu0 0
    %3025 = vmatprep.subr.bf16.mxu0 0
    %3026 = vmatpush2.bf16.msra.mxu0 0
    %3027 = vmatprep.subr.bf16.mxu0 0
    %3028 = vmatpush2.bf16.msra.mxu0 0
    %3029 = vmatprep.subr.bf16.mxu0 0
    %3030 = vmatpush2.bf16.msra.mxu0 0
    %3031 = vmatprep.subr.bf16.mxu0 0
    %3032 = vmatpush2.bf16.msra.mxu0 0
    %3033 = vmatprep.subr.bf16.mxu0 0
    %3034 = vmatpush2.bf16.msra.mxu0 0
    %3035 = vmatprep.subr.bf16.mxu0 0
    %3036 = vmatpush2.bf16.msra.mxu0 0
    %3037 = vmatprep.mubr.bf16.mxu0 0
    %3038 = vmatmul.mubr.bf16.gmra.mxu0 %v2386
    %v3039 = vpop.f32.mrf.mxu0
    %v3040 = vadd.f32 %v2999, %v3039
    %v3041 = vpop.f32.mrf.mxu0
    %v3042 = vadd.f32 %v3001, %v3041
    %v3043 = vpop.f32.mrf.mxu0
    %v3044 = vpop.f32.mrf.mxu0
    %3045 = vdwg.mxu0
    %3046 = vmatprep.subr.bf16.mxu0 %v2803
    %3047 = vmatpush1.bf16.msra.mxu0 %v2802
    %3048 = vmatprep.subr.bf16.mxu0 %v2799
    %3049 = vmatpush1.bf16.msra.mxu0 %v2798
    %3050 = vmatprep.subr.bf16.mxu0 %v2795
    %3051 = vmatpush1.bf16.msra.mxu0 %v2794
    %3052 = vmatprep.subr.bf16.mxu0 %v2791
    %3053 = vmatpush1.bf16.msra.mxu0 %v2790
    %3054 = vmatprep.subr.bf16.mxu0 %v2787
    %3055 = vmatpush1.bf16.msra.mxu0 %v2786
    %3056 = vmatprep.subr.bf16.mxu0 %v2783
    %3057 = vmatpush1.bf16.msra.mxu0 %v2782
    %3058 = vmatprep.subr.bf16.mxu0 %v2779
    %3059 = vmatpush1.bf16.msra.mxu0 %v2778
    %3060 = vmatprep.subr.bf16.mxu0 %v2775
    %3061 = vmatpush1.bf16.msra.mxu0 %v2774
    %3062 = vmatprep.subr.bf16.mxu0 %v2835
    %3063 = vmatpush2.bf16.msra.mxu0 %v2834
    %3064 = vmatprep.subr.bf16.mxu0 %v2831
    %3065 = vmatpush2.bf16.msra.mxu0 %v2830
    %3066 = vmatprep.subr.bf16.mxu0 %v2827
    %3067 = vmatpush2.bf16.msra.mxu0 %v2826
    %3068 = vmatprep.subr.bf16.mxu0 %v2823
    %3069 = vmatpush2.bf16.msra.mxu0 %v2822
    %3070 = vmatprep.subr.bf16.mxu0 %v2819
    %3071 = vmatpush2.bf16.msra.mxu0 %v2818
    %3072 = vmatprep.subr.bf16.mxu0 %v2815
    %3073 = vmatpush2.bf16.msra.mxu0 %v2814
    %3074 = vmatprep.subr.bf16.mxu0 %v2811
    %3075 = vmatpush2.bf16.msra.mxu0 %v2810
    %3076 = vmatprep.subr.bf16.mxu0 %v2807
    %3077 = vmatpush2.bf16.msra.mxu0 %v2806
    %3078 = vmatprep.mubr.bf16.mxu0 %v2385
    %3079 = vmatmul.mubr.bf16.gmra.mxu0 %v2384
    %v3080 = vpop.f32.mrf.mxu0
    %v3081 = vadd.f32 0.0, %v3080
    %v3082 = vpop.f32.mrf.mxu0
    %v3083 = vadd.f32 0.0, %v3082
    %v3084 = vpop.f32.mrf.mxu0
    %v3085 = vpop.f32.mrf.mxu0
    %3086 = vdwg.mxu0
    %3087 = vmatprep.subr.bf16.mxu0 %v2867
    %3088 = vmatpush1.bf16.msra.mxu0 %v2866
    %3089 = vmatprep.subr.bf16.mxu0 %v2863
    %3090 = vmatpush1.bf16.msra.mxu0 %v2862
    %3091 = vmatprep.subr.bf16.mxu0 %v2859
    %3092 = vmatpush1.bf16.msra.mxu0 %v2858
    %3093 = vmatprep.subr.bf16.mxu0 %v2855
    %3094 = vmatpush1.bf16.msra.mxu0 %v2854
    %3095 = vmatprep.subr.bf16.mxu0 %v2851
    %3096 = vmatpush1.bf16.msra.mxu0 %v2850
    %3097 = vmatprep.subr.bf16.mxu0 %v2847
    %3098 = vmatpush1.bf16.msra.mxu0 %v2846
    %3099 = vmatprep.subr.bf16.mxu0 %v2843
    %3100 = vmatpush1.bf16.msra.mxu0 %v2842
    %3101 = vmatprep.subr.bf16.mxu0 %v2839
    %3102 = vmatpush1.bf16.msra.mxu0 %v2838
    %3103 = vmatprep.subr.bf16.mxu0 0
    %3104 = vmatpush2.bf16.msra.mxu0 0
    %3105 = vmatprep.subr.bf16.mxu0 0
    %3106 = vmatpush2.bf16.msra.mxu0 0
    %3107 = vmatprep.subr.bf16.mxu0 0
    %3108 = vmatpush2.bf16.msra.mxu0 0
    %3109 = vmatprep.subr.bf16.mxu0 0
    %3110 = vmatpush2.bf16.msra.mxu0 0
    %3111 = vmatprep.subr.bf16.mxu0 0
    %3112 = vmatpush2.bf16.msra.mxu0 0
    %3113 = vmatprep.subr.bf16.mxu0 0
    %3114 = vmatpush2.bf16.msra.mxu0 0
    %3115 = vmatprep.subr.bf16.mxu0 0
    %3116 = vmatpush2.bf16.msra.mxu0 0
    %3117 = vmatprep.subr.bf16.mxu0 0
    %3118 = vmatpush2.bf16.msra.mxu0 0
    %3119 = vmatprep.mubr.bf16.mxu0 0
    %3120 = vmatmul.mubr.bf16.gmra.mxu0 %v2386
    %v3121 = vpop.f32.mrf.mxu0
    %v3122 = vadd.f32 %v3081, %v3121
    %v3123 = vpop.f32.mrf.mxu0
    %v3124 = vadd.f32 %v3083, %v3123
    %v3125 = vpop.f32.mrf.mxu0
    %v3126 = vpop.f32.mrf.mxu0
    %3127 = vdwg.mxu0
    %v3128 = vxor.u32 %v3040, 2147483648
    %v3129 = vxor.u32 %v3042, 2147483648
    %v3130 = vxor.u32 %v3122, 2147483648
    %v3131 = vmul.f32 %v3128, 1.442695
    %v3132 = vpow.pop %v3131
    %v3133 = vmul.f32 %v3129, 1.442695
    %v3134 = vpow.pop %v3133
    %v3135 = vmul.f32 %v3130, 1.442695
    %v3136 = vpow.pop %v3135
    %v3137 = vadd.f32 %v3132, 1.0
    %v3138 = vadd.f32 %v3134, 1.0
    %v3139 = vadd.f32 %v3136, 1.0
    %v3140 = vrcp.pop %v3137
    %v3141 = vmul.f32 1.0, %v3140
    %v3142 = vrcp.pop %v3138
    %v3143 = vmul.f32 1.0, %v3142
    %v3144 = vrcp.pop %v3139
    %v3145 = vmul.f32 1.0, %v3144
    %v3146 = vtanh.pop %v3124
    %s3147 = scalar_lea.vmem %s2, 24
    %v3148 = vld [vmem:[%s3147] sm:$0xff]
    %v3149 = vmul.f32 %v3143, %v3148
    %v3150 = vmul.f32 %v3141, %v3146
    %v3151 = vadd.f32 %v3149, %v3150
    %v3152 = vtanh.pop %v3151
    %v3153 = vmul.f32 %v3145, %v3152
    %s3154 = scalar_lea.vmem %s4, 24
    %3155 = vst [vmem:[%s3154] sm:$0xff] %v3153
    %s3156 = scalar_lea.vmem %s5, 24
    %3157 = vst [vmem:[%s3156] sm:$0xff] %v3151
    // Predicated region
    $region22: #{decoder_forward.1} parent=1 // pred_check
      _
    $region23: #{decoder_forward.1} parent=1 // pred_check_branch
      %3159 = sbr.rel (0) target = $region25
    $region24: #{decoder_forward.1} parent=1 // pred_region
      _
    $region25: #{decoder_forward.1} parent=1 // pred_fallthru
      _
    // Predicated region
    $region26: #{decoder_forward.1} parent=1 // pred_check
      _
    $region27: #{decoder_forward.1} parent=1 // pred_check_branch
      %3161 = sbr.rel (0) target = $region29
    $region28: #{decoder_forward.1} parent=1 // pred_region
      _
    $region29: #{decoder_forward.1} parent=1 // pred_fallthru
      _
    // Predicated region
    $region30: #{decoder_forward.1} parent=1 // pred_check
      _
    $region31: #{decoder_forward.1} parent=1 // pred_check_branch
      %3163 = sbr.rel (0) target = $region33
    $region32: #{decoder_forward.1} parent=1 // pred_region
      _
    $region33: #{decoder_forward.1} parent=1 // pred_fallthru
      _
    // Predicated region
    $region34: #{decoder_forward.1} parent=1 // pred_check
      _
    $region35: #{decoder_forward.1} parent=1 // pred_check_branch
      %3165 = sbr.rel (0) target = $region37
    $region36: #{decoder_forward.1} parent=1 // pred_region
      _
    $region37: #{decoder_forward.1} parent=1 // pred_fallthru
      _
    %3166 = vsyncpa [#allocation4], 1

</llo_original>
